<compile_context>
chip_gen: v7x
topology: tpu7x:2x2x1
jax: 0.10.0
libtpu: 0.0.40
codegen_flags: <defaults>
</compile_context>

<pallas_src>
import math
import functools

import jax
import jax.numpy as jnp
from jax.experimental import pallas as pl
from jax.experimental.pallas import tpu as pltpu


def _default_vmem_limit():
    """Scoped-VMEM budget with headroom, derived from the running chip."""
    try:
        phys = int(pltpu.get_tpu_info().vmem_capacity_bytes)
    except Exception:
        phys = 64 * 1024 * 1024              # conservative (v7x-sized) fallback
    # ~3/4 of physical: ~96 MiB on v5e/v6e (128 MiB phys), ~48 MiB on v7x (64 MiB).
    return int(min((phys * 3) // 4, 112 * 1024 * 1024))


_VMEM_LIMIT = _default_vmem_limit()


def _pick_tile(dim, target, align=8):
    """Largest tile <= target that divides `dim` and is `align`-aligned.

    Falls back to the full dimension (always (8,128)-legal since a block equal
    to the full array dim satisfies the constraint).
    """
    if dim <= target:
        return dim
    t = (target // align) * align
    while t >= align:
        if dim % t == 0:
            return t
        t -= align
    # TODO(synk): pad-and-mask truly ragged dims instead of promoting to the
    # full dimension (a huge full-dim block can exceed the scoped VMEM limit).
    return dim


def _const_spec(shape):
    """BlockSpec for a weight block that is identical for every grid step.

    NOTE: on VMEM-tight parts (v7x, 64 MiB) these constant blocks can also be
    single-buffered via `pipeline_mode=pl.Buffered(1)` to reclaim the second,
    redundant pipeline buffer.
    """
    return pl.BlockSpec(shape, lambda b, t, s: (0,) * len(shape))


# ----------------------------------------------------------------------------
# Kernel 1 (optional path): tiled matmul  y = a @ b   (K/V projection)
# ----------------------------------------------------------------------------

def _matmul_kernel(a_ref, b_ref, o_ref, acc_ref):
    @pl.when(pl.program_id(2) == 0)
    def _():
        acc_ref[...] = jnp.zeros_like(acc_ref)

    # Operands are consumed in their native dtype (bf16-ready); f32 accumulate.
    acc_ref[...] += jax.lax.dot_general(
        a_ref[...], b_ref[...],
        dimension_numbers=(((1,), (0,)), ((), ())),
        preferred_element_type=jnp.float32)

    @pl.when(pl.program_id(2) == pl.num_programs(2) - 1)
    def _():
        o_ref[...] = acc_ref[...].astype(o_ref.dtype)


def pallas_matmul(a, b, *, tm=512, tn=512, tk=512):
    """a: (M, K), b: (K, N) -> (M, N); f32 MXU accumulation, out dtype = a.dtype."""
    M, K = a.shape
    K2, N = b.shape
    assert K == K2
    tm = _pick_tile(M, tm, align=8)
    tn = _pick_tile(N, tn, align=128)
    tk = _pick_tile(K, tk, align=128)
    grid = (M // tm, N // tn, K // tk)

    itemsize = jnp.dtype(a.dtype).itemsize
    cost = pl.CostEstimate(
        flops=int(2 * M * N * K),
        transcendentals=0,
        bytes_accessed=int(itemsize * ((N // tn) * M * K      # A re-read per N block
                                       + (M // tm) * K * N    # B re-read per M block
                                       + M * N)))

    return pl.pallas_call(
        _matmul_kernel,
        out_shape=jax.ShapeDtypeStruct((M, N), a.dtype),
        grid_spec=pltpu.PrefetchScalarGridSpec(
            num_scalar_prefetch=0,
            grid=grid,
            in_specs=[
                pl.BlockSpec((tm, tk), lambda i, j, k: (i, k)),
                pl.BlockSpec((tk, tn), lambda i, j, k: (k, j)),
            ],
            out_specs=pl.BlockSpec((tm, tn), lambda i, j, k: (i, j)),
            scratch_shapes=[pltpu.VMEM((tm, tn), jnp.float32)],
        ),
        compiler_params=pltpu.CompilerParams(
            dimension_semantics=("parallel", "parallel", "arbitrary"),
            vmem_limit_bytes=_VMEM_LIMIT),
        cost_estimate=cost,
    )(a, b)


# ----------------------------------------------------------------------------
# Kernel 2: fused Q projection + head-batched flash attention + O projection
# (optionally also the K/V projection, fused per S block).
# ----------------------------------------------------------------------------

def _attn_step(s_idx, kv, x_ref, wq_t_ref, wo_h_ref, o_ref,
               q_scr, k_scr, v_scr, acc_scr, m_scr, l_scr, *, n_head, scale):
    """One (batch, T-block, S-block) grid step of online-softmax cross attention.

    kv: (s_tile, 2*d_model) value for this S block (pre-projected or fused).
    Scratch is head-major so the hot matmuls are single head-batched
    dot_generals with no per-head lane slicing inside the softmax update.
    """
    H = n_head
    hd = q_scr.shape[2]
    D = H * hd

    # --- init + fused Q projection: once per (batch, T-block) ----------------
    @pl.when(s_idx == 0)
    def _():
        q = jax.lax.dot_general(
            x_ref[0], wq_t_ref[...],
            dimension_numbers=(((1,), (0,)), ((), ())),
            preferred_element_type=jnp.float32) * scale      # (t, D) f32, scale folded in
        for h in range(H):                                   # head split once per T-block
            q_scr[h] = q[:, h * hd:(h + 1) * hd].astype(q_scr.dtype)
        acc_scr[...] = jnp.zeros_like(acc_scr)
        m_scr[...] = jnp.full_like(m_scr, -jnp.inf)
        l_scr[...] = jnp.zeros_like(l_scr)

    # --- head-major (H, s, hd) views of K / V for this S block ----------------
    kv = kv.astype(k_scr.dtype)
    for h in range(H):
        k_scr[h] = kv[:, h * hd:(h + 1) * hd]
        v_scr[h] = kv[:, D + h * hd:D + (h + 1) * hd]

    # --- head-batched online-softmax update ----------------------------------
    q3 = q_scr[...]                                          # (H, t, hd)
    k3 = k_scr[...]                                          # (H, s, hd)
    v3 = v_scr[...]                                          # (H, s, hd)
    scores = jax.lax.dot_general(                            # (H, t, s) f32
        q3, k3,
        dimension_numbers=(((2,), (2,)), ((0,), (0,))),
        preferred_element_type=jnp.float32)
    m_prev = m_scr[...]                                      # (H, t, 1)
    m_new = jnp.maximum(m_prev, jnp.max(scores, axis=-1, keepdims=True))
    alpha = jnp.exp(m_prev - m_new)
    p = jnp.exp(scores - m_new)                              # (H, t, s) f32
    l_scr[...] = alpha * l_scr[...] + jnp.sum(p, axis=-1, keepdims=True)
    acc_scr[...] = alpha * acc_scr[...] + jax.lax.dot_general(
        p.astype(v3.dtype), v3,                              # (H, t, hd)
        dimension_numbers=(((2,), (1,)), ((0,), (0,))),
        preferred_element_type=jnp.float32)
    m_scr[...] = m_new

    # --- finalize: normalize + head-merge folded into the O projection -------
    @pl.when(s_idx == pl.num_programs(2) - 1)
    def _():
        inv_l = pl.reciprocal(l_scr[...], approx=True)       # (H, t, 1), EUP
        ctx3 = (acc_scr[...] * inv_l).astype(wo_h_ref.dtype)  # (H, t, hd)
        y_h = jax.lax.dot_general(                           # (H, t, D) f32
            ctx3, wo_h_ref[...],
            dimension_numbers=(((2,), (1,)), ((0,), (0,))),
            preferred_element_type=jnp.float32)
        y = y_h[0]
        for h in range(1, H):                                # cheap VPU head-reduce
            y = y + y_h[h]
        o_ref[0] = y.astype(o_ref.dtype)                     # lane-dense (t, D) store


def _fused_attn_kernel(x_ref, mem_ref, wq_t_ref, wkv_t_ref, wo_h_ref, o_ref,
                       q_scr, k_scr, v_scr, acc_scr, m_scr, l_scr,
                       *, n_head, scale):
    # Fused K/V projection for this S block: kv never touches HBM.
    kv = jax.lax.dot_general(
        mem_ref[0], wkv_t_ref[...],
        dimension_numbers=(((1,), (0,)), ((), ())),
        preferred_element_type=jnp.float32)                  # (s, 2D)
    _attn_step(pl.program_id(2), kv, x_ref, wq_t_ref, wo_h_ref, o_ref,
               q_scr, k_scr, v_scr, acc_scr, m_scr, l_scr,
               n_head=n_head, scale=scale)


def _kv_attn_kernel(x_ref, kv_ref, wq_t_ref, wo_h_ref, o_ref,
                    q_scr, k_scr, v_scr, acc_scr, m_scr, l_scr,
                    *, n_head, scale):
    _attn_step(pl.program_id(2), kv_ref[0], x_ref, wq_t_ref, wo_h_ref, o_ref,
               q_scr, k_scr, v_scr, acc_scr, m_scr, l_scr,
               n_head=n_head, scale=scale)


def _attention_pallas_call(x, side_input, wq_t, wo_heads, *, n_head, t_tile,
                           s_tile, fused, wkv_t=None):
    B, T, D = x.shape
    S = side_input.shape[1]
    side_feat = side_input.shape[2]          # memory_dim (fused) or 2*D (kv path)
    H = n_head
    hd = D // H
    scale = 1.0 / math.sqrt(hd)
    t_tile = _pick_tile(T, t_tile, align=8)
    s_tile = _pick_tile(S, s_tile, align=8)
    t_blocks, s_blocks = T // t_tile, S // s_tile
    grid = (B, t_blocks, s_blocks)
    # NOTE(v7x megacore): keep B * t_blocks >= 2 so both TensorCores get work.

    itemsize = jnp.dtype(x.dtype).itemsize
    flops = (4 * B * T * D * D                       # q_proj + o_proj
             + 4 * B * T * S * D)                    # scores + p@v (all heads)
    if fused:
        flops += 2 * B * S * side_feat * (2 * D) * t_blocks   # kv proj per T block
    weight_bytes = itemsize * (D * D + H * hd * D
                               + (side_feat * 2 * D if fused else 0))
    bytes_accessed = itemsize * (B * T * D                       # x
                                 + t_blocks * B * S * side_feat  # kv/memory re-read per T block
                                 + B * T * D) + weight_bytes     # out + weights
    cost = pl.CostEstimate(flops=int(flops),
                           transcendentals=int(B * H * T * (S + s_blocks)),
                           bytes_accessed=int(bytes_accessed))

    in_specs = [
        pl.BlockSpec((1, t_tile, D), lambda b, t, s: (b, t, 0)),
        pl.BlockSpec((1, s_tile, side_feat), lambda b, t, s: (b, s, 0)),
        _const_spec((D, D)),                 # wq_t, resident
    ]
    operands = [x, side_input, wq_t]
    if fused:
        in_specs.append(_const_spec(wkv_t.shape))   # fused K/V weights, resident
        operands.append(wkv_t)
    in_specs.append(_const_spec((H, hd, D)))        # wo (head-split), resident
    operands.append(wo_heads)

    kernel = functools.partial(_fused_attn_kernel if fused else _kv_attn_kernel,
                               n_head=H, scale=scale)

    scratch_shapes = [
        pltpu.VMEM((H, t_tile, hd), x.dtype),      # scaled q, head-major
        pltpu.VMEM((H, s_tile, hd), x.dtype),      # k, head-major
        pltpu.VMEM((H, s_tile, hd), x.dtype),      # v, head-major
        pltpu.VMEM((H, t_tile, hd), jnp.float32),  # output accumulator
        pltpu.VMEM((H, t_tile, 1), jnp.float32),   # running max
        pltpu.VMEM((H, t_tile, 1), jnp.float32),   # running denominator
    ]

    return pl.pallas_call(
        kernel,
        out_shape=jax.ShapeDtypeStruct((B, T, D), x.dtype),
        grid_spec=pltpu.PrefetchScalarGridSpec(
            num_scalar_prefetch=0,
            grid=grid,
            in_specs=in_specs,
            out_specs=pl.BlockSpec((1, t_tile, D), lambda b, t, s: (b, t, 0)),
            scratch_shapes=scratch_shapes,
        ),
        compiler_params=pltpu.CompilerParams(
            dimension_semantics=("parallel", "parallel", "arbitrary"),
            vmem_limit_bytes=_VMEM_LIMIT),
        cost_estimate=cost,
    )(*operands)


def cross_attention(x, memory, wq_t, wkv_t, wo_heads, *, n_head,
                    t_tile=256, s_tile=512, fuse_kv=None):
    """CrossAttention forward.  Weights pre-arranged ONCE at load time:
         wq_t     = wq.T                           (d_model, d_model)
         wkv_t    = [wk.T | wv.T]                  (memory_dim, 2*d_model)
         wo_heads = wo.T.reshape(H, hd, d_model)   (n_head, head_dim, d_model)
    """
    B, T, D = x.shape
    assert D % n_head == 0
    tt = _pick_tile(T, t_tile, align=8)
    if fuse_kv is None:
        # Fusing recomputes the K/V projection once per T block; worth it
        # (removes the kv HBM roundtrip) when there are few T blocks.
        fuse_kv = (T // tt) <= 2
    if fuse_kv:
        return _attention_pallas_call(x, memory, wq_t, wo_heads, n_head=n_head,
                                      t_tile=t_tile, s_tile=s_tile,
                                      fused=True, wkv_t=wkv_t)
    # Two-kernel path: project K/V once; kv keeps the input dtype (pass bf16
    # memory / weights on bf16 models to keep this HBM stream narrow).
    S, memory_dim = memory.shape[1], memory.shape[2]
    kv = pallas_matmul(memory.reshape(B * S, memory_dim), wkv_t)
    kv = kv.reshape(B, S, 2 * D)
    return _attention_pallas_call(x, kv, wq_t, wo_heads, n_head=n_head,
                                  t_tile=t_tile, s_tile=s_tile, fused=False)


# ----------------------------------------------------------------------------
# Pure-JAX reference (mirrors the PyTorch module) for the correctness check.
# ----------------------------------------------------------------------------

def cross_attention_ref(x, memory, wq, wk, wv, wo, n_head):
    B, T, d_model = x.shape
    S = memory.shape[1]
    head_dim = d_model // n_head
    q = (x @ wq.T).reshape(B, T, n_head, head_dim).transpose(0, 2, 1, 3)
    k = (memory @ wk.T).reshape(B, S, n_head, head_dim).transpose(0, 2, 1, 3)
    v = (memory @ wv.T).reshape(B, S, n_head, head_dim).transpose(0, 2, 1, 3)
    scores = jnp.einsum("bhtd,bhsd->bhts", q, k) / math.sqrt(head_dim)
    attn = jax.nn.softmax(scores, axis=-1)
    out = jnp.einsum("bhts,bhsd->bhtd", attn, v)
    out = out.transpose(0, 2, 1, 3).reshape(B, T, d_model)
    return out @ wo.T


# ----------------------------------------------------------------------------
# Main
# ----------------------------------------------------------------------------

def _run_case(B, T, S, d_model, memory_dim, n_head, *, t_tile, s_tile, fuse_kv):
    key = jax.random.PRNGKey(0)
    k_x, k_m, k_wq, k_wk, k_wv, k_wo = jax.random.split(key, 6)

    x = jax.random.normal(k_x, (B, T, d_model), dtype=jnp.float32)
    memory = jax.random.normal(k_m, (B, S, memory_dim), dtype=jnp.float32)

    # PyTorch nn.Linear layout (out_features, in_features), bias-free.
    wq = 0.05 * jax.random.normal(k_wq, (d_model, d_model), dtype=jnp.float32)
    wk = 0.05 * jax.random.normal(k_wk, (d_model, memory_dim), dtype=jnp.float32)
    wv = 0.05 * jax.random.normal(k_wv, (d_model, memory_dim), dtype=jnp.float32)
    wo = 0.05 * jax.random.normal(k_wo, (d_model, d_model), dtype=jnp.float32)

    # Parameter-load-time preprocessing (done ONCE, not per forward).
    head_dim = d_model // n_head
    wq_t = wq.T                                          # (D, D)
    wkv_t = jnp.concatenate([wk.T, wv.T], axis=1)        # (memory_dim, 2D)
    wo_heads = wo.T.reshape(n_head, head_dim, d_model)   # (H, hd, D)

    fwd = jax.jit(functools.partial(cross_attention, n_head=n_head,
                                    t_tile=t_tile, s_tile=s_tile,
                                    fuse_kv=fuse_kv))
    out = jax.block_until_ready(fwd(x, memory, wq_t, wkv_t, wo_heads))

    ref = cross_attention_ref(x, memory, wq, wk, wv, wo, n_head)
    assert out.shape == (B, T, d_model)
    # Slightly loose tolerance because the softmax denominator uses the EUP
    # approx reciprocal.
    assert jnp.allclose(out, ref, atol=2e-3, rtol=2e-3), "mismatch vs reference"


if __name__ == "__main__":
    # Case 1: fused single-kernel path (K/V projection inside the attention
    # kernel) with multiple S blocks exercising the online softmax.
    _run_case(B=2, T=8, S=16, d_model=32, memory_dim=16, n_head=4,
              t_tile=8, s_tile=8, fuse_kv=True)
    # Case 2: two-kernel path (tiled K/V projection matmul + attention) with
    # multiple T and S blocks exercising accumulator reuse across the grid.
    _run_case(B=2, T=16, S=16, d_model=32, memory_dim=16, n_head=4,
              t_tile=8, s_tile=8, fuse_kv=False)
    print("KERNEL_OK")
</pallas_src>

<mosaic_0001>
module attributes {stable_mosaic.version = 11 : i64} {
  func.func @_fused_attn_kernel(%arg0: i32, %arg1: i32, %arg2: i32, %arg3: memref<1x8x32xf32, #tpu.memory_space<vmem>>, %arg4: memref<1x8x16xf32, #tpu.memory_space<vmem>>, %arg5: memref<32x32xf32, #tpu.memory_space<vmem>>, %arg6: memref<16x64xf32, #tpu.memory_space<vmem>>, %arg7: memref<4x8x32xf32, #tpu.memory_space<vmem>>, %arg8: memref<1x8x32xf32, #tpu.memory_space<vmem>>, %arg9: memref<4x8x8xf32, #tpu.memory_space<vmem>>, %arg10: memref<4x8x8xf32, #tpu.memory_space<vmem>>, %arg11: memref<4x8x8xf32, #tpu.memory_space<vmem>>, %arg12: memref<4x8x8xf32, #tpu.memory_space<vmem>>, %arg13: memref<4x8x1xf32, #tpu.memory_space<vmem>>, %arg14: memref<4x8x1xf32, #tpu.memory_space<vmem>>) attributes {dimension_semantics = [#tpu.dimension_semantics<parallel>, #tpu.dimension_semantics<parallel>, #tpu.dimension_semantics<arbitrary>], iteration_bounds = array<i64: 2, 1, 2>, scalar_prefetch = 0 : i64, scratch_operands = 6 : i64, tpu.core_type = #tpu.core_type<tc>, window_params = [{transform_indices = @transform_0, window_bounds = array<i64: 1, 8, 32>}, {transform_indices = @transform_1, window_bounds = array<i64: 1, 8, 16>}, {pipeline_mode = #tpu.pipeline_mode<synchronous>, transform_indices = @transform_2, window_bounds = array<i64: 32, 32>}, {pipeline_mode = #tpu.pipeline_mode<synchronous>, transform_indices = @transform_3, window_bounds = array<i64: 16, 64>}, {pipeline_mode = #tpu.pipeline_mode<synchronous>, transform_indices = @transform_4, window_bounds = array<i64: 4, 8, 32>}, {transform_indices = @transform_5, window_bounds = array<i64: 1, 8, 32>}]} {
    %c0 = arith.constant 0 : index
    %c0_0 = arith.constant 0 : index
    %c0_1 = arith.constant 0 : index
    %0 = vector.load %arg4[%c0, %c0_0, %c0_1] : memref<1x8x16xf32, #tpu.memory_space<vmem>>, vector<1x8x16xf32>
    %1 = vector.shape_cast %0 : vector<1x8x16xf32> to vector<8x16xf32>
    %c0_2 = arith.constant 0 : index
    %c0_3 = arith.constant 0 : index
    %2 = vector.load %arg6[%c0_2, %c0_3] : memref<16x64xf32, #tpu.memory_space<vmem>>, vector<16x64xf32>
    %cst = arith.constant dense<0.000000e+00> : vector<8x64xf32>
    %3 = tpu.matmul %1, %2, %cst {dimension_numbers = #tpu.dot_dimension_numbers<[1], [0], [0], [1], [0, 0, 1, 1], [], []>} : vector<8x16xf32>, vector<16x64xf32>, vector<8x64xf32> -> vector<8x64xf32>
    %c0_i32 = arith.constant 0 : i32
    %4 = arith.cmpi eq, %arg2, %c0_i32 : i32
    %5 = arith.extui %4 : i1 to i32
    %c0_i32_4 = arith.constant 0 : i32
    %6 = arith.cmpi ne, %5, %c0_i32_4 : i32
    scf.if %6 {
      %c0_58 = arith.constant 0 : index
      %c0_59 = arith.constant 0 : index
      %c0_60 = arith.constant 0 : index
      %68 = vector.load %arg3[%c0_58, %c0_59, %c0_60] : memref<1x8x32xf32, #tpu.memory_space<vmem>>, vector<1x8x32xf32>
      %69 = vector.shape_cast %68 : vector<1x8x32xf32> to vector<8x32xf32>
      %c0_61 = arith.constant 0 : index
      %c0_62 = arith.constant 0 : index
      %70 = vector.load %arg5[%c0_61, %c0_62] : memref<32x32xf32, #tpu.memory_space<vmem>>, vector<32x32xf32>
      %cst_63 = arith.constant dense<0.000000e+00> : vector<8x32xf32>
      %71 = tpu.matmul %69, %70, %cst_63 {dimension_numbers = #tpu.dot_dimension_numbers<[1], [0], [0], [1], [0, 0, 1, 1], [], []>} : vector<8x32xf32>, vector<32x32xf32>, vector<8x32xf32> -> vector<8x32xf32>
      %cst_64 = arith.constant 0.353553385 : f32
      %72 = vector.broadcast %cst_64 : f32 to vector<8x32xf32>
      %73 = arith.mulf %71, %72 : vector<8x32xf32>
      %74 = vector.extract_strided_slice %73 {offsets = [0, 0], sizes = [8, 8], strides = [1, 1]} : vector<8x32xf32> to vector<8x8xf32>
      %c0_65 = arith.constant 0 : index
      %c0_66 = arith.constant 0 : index
      %c0_67 = arith.constant 0 : index
      %75 = vector.load %arg9[%c0_65, %c0_66, %c0_67] : memref<4x8x8xf32, #tpu.memory_space<vmem>>, vector<1x8x8xf32>
      %76 = vector.shape_cast %75 : vector<1x8x8xf32> to vector<8x8xf32>
      %77 = vector.shape_cast %74 : vector<8x8xf32> to vector<1x8x8xf32>
      tpu.vector_store %arg9[%c0_65, %c0_66, %c0_67], %77 {strides = array<i32>} : memref<4x8x8xf32, #tpu.memory_space<vmem>>, vector<1x8x8xf32>,
      %78 = vector.extract_strided_slice %73 {offsets = [0, 8], sizes = [8, 8], strides = [1, 1]} : vector<8x32xf32> to vector<8x8xf32>
      %c1_68 = arith.constant 1 : index
      %c0_69 = arith.constant 0 : index
      %c0_70 = arith.constant 0 : index
      %79 = vector.load %arg9[%c1_68, %c0_69, %c0_70] : memref<4x8x8xf32, #tpu.memory_space<vmem>>, vector<1x8x8xf32>
      %80 = vector.shape_cast %79 : vector<1x8x8xf32> to vector<8x8xf32>
      %81 = vector.shape_cast %78 : vector<8x8xf32> to vector<1x8x8xf32>
      tpu.vector_store %arg9[%c1_68, %c0_69, %c0_70], %81 {strides = array<i32>} : memref<4x8x8xf32, #tpu.memory_space<vmem>>, vector<1x8x8xf32>,
      %82 = vector.extract_strided_slice %73 {offsets = [0, 16], sizes = [8, 8], strides = [1, 1]} : vector<8x32xf32> to vector<8x8xf32>
      %c2_71 = arith.constant 2 : index
      %c0_72 = arith.constant 0 : index
      %c0_73 = arith.constant 0 : index
      %83 = vector.load %arg9[%c2_71, %c0_72, %c0_73] : memref<4x8x8xf32, #tpu.memory_space<vmem>>, vector<1x8x8xf32>
      %84 = vector.shape_cast %83 : vector<1x8x8xf32> to vector<8x8xf32>
      %85 = vector.shape_cast %82 : vector<8x8xf32> to vector<1x8x8xf32>
      tpu.vector_store %arg9[%c2_71, %c0_72, %c0_73], %85 {strides = array<i32>} : memref<4x8x8xf32, #tpu.memory_space<vmem>>, vector<1x8x8xf32>,
      %86 = vector.extract_strided_slice %73 {offsets = [0, 24], sizes = [8, 8], strides = [1, 1]} : vector<8x32xf32> to vector<8x8xf32>
      %c3_74 = arith.constant 3 : index
      %c0_75 = arith.constant 0 : index
      %c0_76 = arith.constant 0 : index
      %87 = vector.load %arg9[%c3_74, %c0_75, %c0_76] : memref<4x8x8xf32, #tpu.memory_space<vmem>>, vector<1x8x8xf32>
      %88 = vector.shape_cast %87 : vector<1x8x8xf32> to vector<8x8xf32>
      %89 = vector.shape_cast %86 : vector<8x8xf32> to vector<1x8x8xf32>
      tpu.vector_store %arg9[%c3_74, %c0_75, %c0_76], %89 {strides = array<i32>} : memref<4x8x8xf32, #tpu.memory_space<vmem>>, vector<1x8x8xf32>,
      %cst_77 = arith.constant 0.000000e+00 : f32
      %90 = vector.broadcast %cst_77 : f32 to vector<4x8x8xf32>
      %c0_78 = arith.constant 0 : index
      %c0_79 = arith.constant 0 : index
      %c0_80 = arith.constant 0 : index
      %91 = vector.load %arg12[%c0_78, %c0_79, %c0_80] : memref<4x8x8xf32, #tpu.memory_space<vmem>>, vector<4x8x8xf32>
      tpu.vector_store %arg12[%c0_78, %c0_79, %c0_80], %90 {strides = array<i32>} : memref<4x8x8xf32, #tpu.memory_space<vmem>>, vector<4x8x8xf32>,
      %cst_81 = arith.constant 0xFF800000 : f32
      %92 = vector.broadcast %cst_81 : f32 to vector<4x8x1xf32>
      %c0_82 = arith.constant 0 : index
      %c0_83 = arith.constant 0 : index
      %c0_84 = arith.constant 0 : index
      %93 = vector.load %arg13[%c0_82, %c0_83, %c0_84] : memref<4x8x1xf32, #tpu.memory_space<vmem>>, vector<4x8x1xf32>
      tpu.vector_store %arg13[%c0_82, %c0_83, %c0_84], %92 {strides = array<i32>} : memref<4x8x1xf32, #tpu.memory_space<vmem>>, vector<4x8x1xf32>,
      %cst_85 = arith.constant 0.000000e+00 : f32
      %94 = vector.broadcast %cst_85 : f32 to vector<4x8x1xf32>
      %c0_86 = arith.constant 0 : index
      %c0_87 = arith.constant 0 : index
      %c0_88 = arith.constant 0 : index
      %95 = vector.load %arg14[%c0_86, %c0_87, %c0_88] : memref<4x8x1xf32, #tpu.memory_space<vmem>>, vector<4x8x1xf32>
      tpu.vector_store %arg14[%c0_86, %c0_87, %c0_88], %94 {strides = array<i32>} : memref<4x8x1xf32, #tpu.memory_space<vmem>>, vector<4x8x1xf32>,
    } else {
    }
    %7 = vector.extract_strided_slice %3 {offsets = [0, 0], sizes = [8, 8], strides = [1, 1]} : vector<8x64xf32> to vector<8x8xf32>
    %c0_5 = arith.constant 0 : index
    %c0_6 = arith.constant 0 : index
    %c0_7 = arith.constant 0 : index
    %8 = vector.load %arg10[%c0_5, %c0_6, %c0_7] : memref<4x8x8xf32, #tpu.memory_space<vmem>>, vector<1x8x8xf32>
    %9 = vector.shape_cast %8 : vector<1x8x8xf32> to vector<8x8xf32>
    %10 = vector.shape_cast %7 : vector<8x8xf32> to vector<1x8x8xf32>
    tpu.vector_store %arg10[%c0_5, %c0_6, %c0_7], %10 {strides = array<i32>} : memref<4x8x8xf32, #tpu.memory_space<vmem>>, vector<1x8x8xf32>,
    %11 = vector.extract_strided_slice %3 {offsets = [0, 32], sizes = [8, 8], strides = [1, 1]} : vector<8x64xf32> to vector<8x8xf32>
    %c0_8 = arith.constant 0 : index
    %c0_9 = arith.constant 0 : index
    %c0_10 = arith.constant 0 : index
    %12 = vector.load %arg11[%c0_8, %c0_9, %c0_10] : memref<4x8x8xf32, #tpu.memory_space<vmem>>, vector<1x8x8xf32>
    %13 = vector.shape_cast %12 : vector<1x8x8xf32> to vector<8x8xf32>
    %14 = vector.shape_cast %11 : vector<8x8xf32> to vector<1x8x8xf32>
    tpu.vector_store %arg11[%c0_8, %c0_9, %c0_10], %14 {strides = array<i32>} : memref<4x8x8xf32, #tpu.memory_space<vmem>>, vector<1x8x8xf32>,
    %15 = vector.extract_strided_slice %3 {offsets = [0, 8], sizes = [8, 8], strides = [1, 1]} : vector<8x64xf32> to vector<8x8xf32>
    %c1 = arith.constant 1 : index
    %c0_11 = arith.constant 0 : index
    %c0_12 = arith.constant 0 : index
    %16 = vector.load %arg10[%c1, %c0_11, %c0_12] : memref<4x8x8xf32, #tpu.memory_space<vmem>>, vector<1x8x8xf32>
    %17 = vector.shape_cast %16 : vector<1x8x8xf32> to vector<8x8xf32>
    %18 = vector.shape_cast %15 : vector<8x8xf32> to vector<1x8x8xf32>
    tpu.vector_store %arg10[%c1, %c0_11, %c0_12], %18 {strides = array<i32>} : memref<4x8x8xf32, #tpu.memory_space<vmem>>, vector<1x8x8xf32>,
    %19 = vector.extract_strided_slice %3 {offsets = [0, 40], sizes = [8, 8], strides = [1, 1]} : vector<8x64xf32> to vector<8x8xf32>
    %c1_13 = arith.constant 1 : index
    %c0_14 = arith.constant 0 : index
    %c0_15 = arith.constant 0 : index
    %20 = vector.load %arg11[%c1_13, %c0_14, %c0_15] : memref<4x8x8xf32, #tpu.memory_space<vmem>>, vector<1x8x8xf32>
    %21 = vector.shape_cast %20 : vector<1x8x8xf32> to vector<8x8xf32>
    %22 = vector.shape_cast %19 : vector<8x8xf32> to vector<1x8x8xf32>
    tpu.vector_store %arg11[%c1_13, %c0_14, %c0_15], %22 {strides = array<i32>} : memref<4x8x8xf32, #tpu.memory_space<vmem>>, vector<1x8x8xf32>,
    %23 = vector.extract_strided_slice %3 {offsets = [0, 16], sizes = [8, 8], strides = [1, 1]} : vector<8x64xf32> to vector<8x8xf32>
    %c2 = arith.constant 2 : index
    %c0_16 = arith.constant 0 : index
    %c0_17 = arith.constant 0 : index
    %24 = vector.load %arg10[%c2, %c0_16, %c0_17] : memref<4x8x8xf32, #tpu.memory_space<vmem>>, vector<1x8x8xf32>
    %25 = vector.shape_cast %24 : vector<1x8x8xf32> to vector<8x8xf32>
    %26 = vector.shape_cast %23 : vector<8x8xf32> to vector<1x8x8xf32>
    tpu.vector_store %arg10[%c2, %c0_16, %c0_17], %26 {strides = array<i32>} : memref<4x8x8xf32, #tpu.memory_space<vmem>>, vector<1x8x8xf32>,
    %27 = vector.extract_strided_slice %3 {offsets = [0, 48], sizes = [8, 8], strides = [1, 1]} : vector<8x64xf32> to vector<8x8xf32>
    %c2_18 = arith.constant 2 : index
    %c0_19 = arith.constant 0 : index
    %c0_20 = arith.constant 0 : index
    %28 = vector.load %arg11[%c2_18, %c0_19, %c0_20] : memref<4x8x8xf32, #tpu.memory_space<vmem>>, vector<1x8x8xf32>
    %29 = vector.shape_cast %28 : vector<1x8x8xf32> to vector<8x8xf32>
    %30 = vector.shape_cast %27 : vector<8x8xf32> to vector<1x8x8xf32>
    tpu.vector_store %arg11[%c2_18, %c0_19, %c0_20], %30 {strides = array<i32>} : memref<4x8x8xf32, #tpu.memory_space<vmem>>, vector<1x8x8xf32>,
    %31 = vector.extract_strided_slice %3 {offsets = [0, 24], sizes = [8, 8], strides = [1, 1]} : vector<8x64xf32> to vector<8x8xf32>
    %c3 = arith.constant 3 : index
    %c0_21 = arith.constant 0 : index
    %c0_22 = arith.constant 0 : index
    %32 = vector.load %arg10[%c3, %c0_21, %c0_22] : memref<4x8x8xf32, #tpu.memory_space<vmem>>, vector<1x8x8xf32>
    %33 = vector.shape_cast %32 : vector<1x8x8xf32> to vector<8x8xf32>
    %34 = vector.shape_cast %31 : vector<8x8xf32> to vector<1x8x8xf32>
    tpu.vector_store %arg10[%c3, %c0_21, %c0_22], %34 {strides = array<i32>} : memref<4x8x8xf32, #tpu.memory_space<vmem>>, vector<1x8x8xf32>,
    %35 = vector.extract_strided_slice %3 {offsets = [0, 56], sizes = [8, 8], strides = [1, 1]} : vector<8x64xf32> to vector<8x8xf32>
    %c3_23 = arith.constant 3 : index
    %c0_24 = arith.constant 0 : index
    %c0_25 = arith.constant 0 : index
    %36 = vector.load %arg11[%c3_23, %c0_24, %c0_25] : memref<4x8x8xf32, #tpu.memory_space<vmem>>, vector<1x8x8xf32>
    %37 = vector.shape_cast %36 : vector<1x8x8xf32> to vector<8x8xf32>
    %38 = vector.shape_cast %35 : vector<8x8xf32> to vector<1x8x8xf32>
    tpu.vector_store %arg11[%c3_23, %c0_24, %c0_25], %38 {strides = array<i32>} : memref<4x8x8xf32, #tpu.memory_space<vmem>>, vector<1x8x8xf32>,
    %c0_26 = arith.constant 0 : index
    %c0_27 = arith.constant 0 : index
    %c0_28 = arith.constant 0 : index
    %39 = vector.load %arg9[%c0_26, %c0_27, %c0_28] : memref<4x8x8xf32, #tpu.memory_space<vmem>>, vector<4x8x8xf32>
    %c0_29 = arith.constant 0 : index
    %c0_30 = arith.constant 0 : index
    %c0_31 = arith.constant 0 : index
    %40 = vector.load %arg10[%c0_29, %c0_30, %c0_31] : memref<4x8x8xf32, #tpu.memory_space<vmem>>, vector<4x8x8xf32>
    %c0_32 = arith.constant 0 : index
    %c0_33 = arith.constant 0 : index
    %c0_34 = arith.constant 0 : index
    %41 = vector.load %arg11[%c0_32, %c0_33, %c0_34] : memref<4x8x8xf32, #tpu.memory_space<vmem>>, vector<4x8x8xf32>
    %cst_35 = arith.constant dense<0.000000e+00> : vector<4x8x8xf32>
    %42 = tpu.matmul %39, %40, %cst_35 {dimension_numbers = #tpu.dot_dimension_numbers<[2], [2], [1], [1], [0, 0, 0, 1, 1, 1], [0], [0]>} : vector<4x8x8xf32>, vector<4x8x8xf32>, vector<4x8x8xf32> -> vector<4x8x8xf32>
    %c0_36 = arith.constant 0 : index
    %c0_37 = arith.constant 0 : index
    %c0_38 = arith.constant 0 : index
    %43 = vector.load %arg13[%c0_36, %c0_37, %c0_38] : memref<4x8x1xf32, #tpu.memory_space<vmem>>, vector<4x8x1xf32>
    %cst_39 = arith.constant dense<0xFF800000> : vector<4x8xf32>
    %44 = vector.multi_reduction <maximumf>, %42, %cst_39 [2] : vector<4x8x8xf32> to vector<4x8xf32>
    %45 = vector.shape_cast %44 : vector<4x8xf32> to vector<4x8x1xf32>
    %46 = arith.maximumf %43, %45 : vector<4x8x1xf32>
    %47 = arith.subf %43, %46 : vector<4x8x1xf32>
    %48 = math.exp %47 : vector<4x8x1xf32>
    %49 = vector.broadcast %46 : vector<4x8x1xf32> to vector<4x8x8xf32>
    %50 = arith.subf %42, %49 : vector<4x8x8xf32>
    %51 = math.exp %50 : vector<4x8x8xf32>
    %c0_40 = arith.constant 0 : index
    %c0_41 = arith.constant 0 : index
    %c0_42 = arith.constant 0 : index
    %52 = vector.load %arg14[%c0_40, %c0_41, %c0_42] : memref<4x8x1xf32, #tpu.memory_space<vmem>>, vector<4x8x1xf32>
    %53 = arith.mulf %48, %52 : vector<4x8x1xf32>
    %cst_43 = arith.constant dense<0.000000e+00> : vector<4x8xf32>
    %54 = vector.multi_reduction <add>, %51, %cst_43 [2] : vector<4x8x8xf32> to vector<4x8xf32>
    %55 = vector.shape_cast %54 : vector<4x8xf32> to vector<4x8x1xf32>
    %56 = arith.addf %53, %55 : vector<4x8x1xf32>
    %c0_44 = arith.constant 0 : index
    %c0_45 = arith.constant 0 : index
    %c0_46 = arith.constant 0 : index
    %57 = vector.load %arg14[%c0_44, %c0_45, %c0_46] : memref<4x8x1xf32, #tpu.memory_space<vmem>>, vector<4x8x1xf32>
    tpu.vector_store %arg14[%c0_44, %c0_45, %c0_46], %56 {strides = array<i32>} : memref<4x8x1xf32, #tpu.memory_space<vmem>>, vector<4x8x1xf32>,
    %c0_47 = arith.constant 0 : index
    %c0_48 = arith.constant 0 : index
    %c0_49 = arith.constant 0 : index
    %58 = vector.load %arg12[%c0_47, %c0_48, %c0_49] : memref<4x8x8xf32, #tpu.memory_space<vmem>>, vector<4x8x8xf32>
    %59 = vector.broadcast %48 : vector<4x8x1xf32> to vector<4x8x8xf32>
    %60 = arith.mulf %59, %58 : vector<4x8x8xf32>
    %cst_50 = arith.constant dense<0.000000e+00> : vector<4x8x8xf32>
    %61 = tpu.matmul %51, %41, %cst_50 {dimension_numbers = #tpu.dot_dimension_numbers<[2], [1], [1], [2], [0, 0, 0, 1, 1, 2], [0], [0]>} : vector<4x8x8xf32>, vector<4x8x8xf32>, vector<4x8x8xf32> -> vector<4x8x8xf32>
    %62 = arith.addf %60, %61 : vector<4x8x8xf32>
    %c0_51 = arith.constant 0 : index
    %c0_52 = arith.constant 0 : index
    %c0_53 = arith.constant 0 : index
    %63 = vector.load %arg12[%c0_51, %c0_52, %c0_53] : memref<4x8x8xf32, #tpu.memory_space<vmem>>, vector<4x8x8xf32>
    tpu.vector_store %arg12[%c0_51, %c0_52, %c0_53], %62 {strides = array<i32>} : memref<4x8x8xf32, #tpu.memory_space<vmem>>, vector<4x8x8xf32>,
    %c0_54 = arith.constant 0 : index
    %c0_55 = arith.constant 0 : index
    %c0_56 = arith.constant 0 : index
    %64 = vector.load %arg13[%c0_54, %c0_55, %c0_56] : memref<4x8x1xf32, #tpu.memory_space<vmem>>, vector<4x8x1xf32>
    tpu.vector_store %arg13[%c0_54, %c0_55, %c0_56], %46 {strides = array<i32>} : memref<4x8x1xf32, #tpu.memory_space<vmem>>, vector<4x8x1xf32>,
    %c1_i32 = arith.constant 1 : i32
    %65 = arith.cmpi eq, %arg2, %c1_i32 : i32
    %66 = arith.extui %65 : i1 to i32
    %c0_i32_57 = arith.constant 0 : i32
    %67 = arith.cmpi ne, %66, %c0_i32_57 : i32
    scf.if %67 {
      %c0_58 = arith.constant 0 : index
      %c0_59 = arith.constant 0 : index
      %c0_60 = arith.constant 0 : index
      %68 = vector.load %arg14[%c0_58, %c0_59, %c0_60] : memref<4x8x1xf32, #tpu.memory_space<vmem>>, vector<4x8x1xf32>
      %69 = tpu.reciprocal %68 {approx = true} : vector<4x8x1xf32> -> vector<4x8x1xf32>
      %c0_61 = arith.constant 0 : index
      %c0_62 = arith.constant 0 : index
      %c0_63 = arith.constant 0 : index
      %70 = vector.load %arg12[%c0_61, %c0_62, %c0_63] : memref<4x8x8xf32, #tpu.memory_space<vmem>>, vector<4x8x8xf32>
      %71 = vector.broadcast %69 : vector<4x8x1xf32> to vector<4x8x8xf32>
      %72 = arith.mulf %70, %71 : vector<4x8x8xf32>
      %c0_64 = arith.constant 0 : index
      %c0_65 = arith.constant 0 : index
      %c0_66 = arith.constant 0 : index
      %73 = vector.load %arg7[%c0_64, %c0_65, %c0_66] : memref<4x8x32xf32, #tpu.memory_space<vmem>>, vector<4x8x32xf32>
      %cst_67 = arith.constant dense<0.000000e+00> : vector<4x8x32xf32>
      %74 = tpu.matmul %72, %73, %cst_67 {dimension_numbers = #tpu.dot_dimension_numbers<[2], [1], [1], [2], [0, 0, 0, 1, 1, 2], [0], [0]>} : vector<4x8x8xf32>, vector<4x8x32xf32>, vector<4x8x32xf32> -> vector<4x8x32xf32>
      %75 = vector.extract_strided_slice %74 {offsets = [0, 0, 0], sizes = [1, 8, 32], strides = [1, 1, 1]} : vector<4x8x32xf32> to vector<1x8x32xf32>
      %76 = vector.shape_cast %75 : vector<1x8x32xf32> to vector<8x32xf32>
      %77 = vector.extract_strided_slice %74 {offsets = [1, 0, 0], sizes = [1, 8, 32], strides = [1, 1, 1]} : vector<4x8x32xf32> to vector<1x8x32xf32>
      %78 = vector.shape_cast %77 : vector<1x8x32xf32> to vector<8x32xf32>
      %79 = arith.addf %76, %78 : vector<8x32xf32>
      %80 = vector.extract_strided_slice %74 {offsets = [2, 0, 0], sizes = [1, 8, 32], strides = [1, 1, 1]} : vector<4x8x32xf32> to vector<1x8x32xf32>
      %81 = vector.shape_cast %80 : vector<1x8x32xf32> to vector<8x32xf32>
      %82 = arith.addf %79, %81 : vector<8x32xf32>
      %83 = vector.extract_strided_slice %74 {offsets = [3, 0, 0], sizes = [1, 8, 32], strides = [1, 1, 1]} : vector<4x8x32xf32> to vector<1x8x32xf32>
      %84 = vector.shape_cast %83 : vector<1x8x32xf32> to vector<8x32xf32>
      %85 = arith.addf %82, %84 : vector<8x32xf32>
      %c0_68 = arith.constant 0 : index
      %c0_69 = arith.constant 0 : index
      %c0_70 = arith.constant 0 : index
      %86 = vector.load %arg8[%c0_68, %c0_69, %c0_70] : memref<1x8x32xf32, #tpu.memory_space<vmem>>, vector<1x8x32xf32>
      %87 = vector.shape_cast %86 : vector<1x8x32xf32> to vector<8x32xf32>
      %88 = vector.shape_cast %85 : vector<8x32xf32> to vector<1x8x32xf32>
      tpu.vector_store %arg8[%c0_68, %c0_69, %c0_70], %88 {strides = array<i32>} : memref<1x8x32xf32, #tpu.memory_space<vmem>>, vector<1x8x32xf32>,
    } else {
    }
    return
  }
  func.func @transform_0(%arg0: i32, %arg1: i32, %arg2: i32) -> (i32, i32, i32) {
    %c0_i32 = arith.constant 0 : i32
    %c0_i32_0 = arith.constant 0 : i32
    return %arg0, %arg1, %c0_i32 : i32, i32, i32
  }
  func.func @transform_1(%arg0: i32, %arg1: i32, %arg2: i32) -> (i32, i32, i32) {
    %c0_i32 = arith.constant 0 : i32
    %c0_i32_0 = arith.constant 0 : i32
    return %arg0, %arg2, %c0_i32 : i32, i32, i32
  }
  func.func @transform_2(%arg0: i32, %arg1: i32, %arg2: i32) -> (i32, i32) {
    %c0_i32 = arith.constant 0 : i32
    %c0_i32_0 = arith.constant 0 : i32
    %c0_i32_1 = arith.constant 0 : i32
    return %c0_i32, %c0_i32_0 : i32, i32
  }
  func.func @transform_3(%arg0: i32, %arg1: i32, %arg2: i32) -> (i32, i32) {
    %c0_i32 = arith.constant 0 : i32
    %c0_i32_0 = arith.constant 0 : i32
    %c0_i32_1 = arith.constant 0 : i32
    return %c0_i32, %c0_i32_0 : i32, i32
  }
  func.func @transform_4(%arg0: i32, %arg1: i32, %arg2: i32) -> (i32, i32, i32) {
    %c0_i32 = arith.constant 0 : i32
    %c0_i32_0 = arith.constant 0 : i32
    %c0_i32_1 = arith.constant 0 : i32
    %c0_i32_2 = arith.constant 0 : i32
    return %c0_i32, %c0_i32_0, %c0_i32_1 : i32, i32, i32
  }
  func.func @transform_5(%arg0: i32, %arg1: i32, %arg2: i32) -> (i32, i32, i32) {
    %c0_i32 = arith.constant 0 : i32
    %c0_i32_0 = arith.constant 0 : i32
    return %arg0, %arg1, %c0_i32 : i32, i32, i32
  }
}

</mosaic_0001>

<llo_original>
// kernel: cross_attention.1
$region0: #{cross_attention.1}
  #allocation0 [shape = 'u32[]', space=smem, size = 0x4, offset = 0x4, fixed_abs, tag = 'smem constant byte address 0x4 - core index']
  #allocation1 [shape = 'u32[144,128]{1,0:T(1,128)}', space=vmem, size = 0x12000, scoped, tag = 'internal scratch']
  #allocation2 [shape = 'f32[4,8,8]{2,1,0:T(8,128)}', space=vmem, size = 0x4000, scoped, tag = 'scratch operand']
  #allocation3 [shape = 'f32[4,8,8]{2,1,0:T(8,128)}', space=vmem, size = 0x4000, scoped, tag = 'scratch operand']
  #allocation4 [shape = 'f32[4,8,8]{2,1,0:T(8,128)}', space=vmem, size = 0x4000, scoped, tag = 'scratch operand']
  #allocation5 [shape = 'f32[4,8,8]{2,1,0:T(8,128)}', space=vmem, size = 0x4000, scoped, tag = 'scratch operand']
  #allocation6 [shape = 'f32[4,8,1]{2,1,0:T(8,128)}', space=vmem, size = 0x4000, scoped, tag = 'scratch operand']
  #allocation7 [shape = 'f32[4,8,1]{2,1,0:T(8,128)}', space=vmem, size = 0x4000, scoped, tag = 'scratch operand']
  %s0 = inlined_call_operand.hbm [shape: f32[2,8,32], index: 0, kind: input, shape index: {}]
  %s1 = inlined_call_operand.hbm [shape: f32[2,16,16], index: 1, kind: input, shape index: {}]
  %s2 = inlined_call_operand.hbm [shape: f32[32,32], index: 2, kind: input, shape index: {}]
  %s3 = inlined_call_operand.hbm [shape: f32[16,64], index: 3, kind: input, shape index: {}]
  %s4 = inlined_call_operand.hbm [shape: f32[4,8,32], index: 4, kind: input, shape index: {}]
  %s5 = inlined_call_operand.hbm [shape: f32[2,8,32], index: 5, kind: output, shape index: {}]
  %s6 = sld [smem:[#allocation0]]
  $region81: #{cross_attention.1} parent=0
    _
  %s8 = ssub.s32 1, %s6
  %s9 = scalar_select 0, %s8, %s6
  $region1: #{cross_attention.1} parent=0
    #allocation8 [shape = 'u8[8192]{0}', space=vmem, size = 0x2000, scoped, tag = 'input window, operand 0']
    #allocation9 [shape = 's32[2]{0}', space=sflag, size = 0x8, scoped, tag = 'scoped memory for cross_attention.1']
    #allocation10 [shape = 's32[2]{0}', space=sflag, size = 0x8, scoped, tag = 'scoped memory for cross_attention.1']
    #allocation11 [shape = 'u8[8192]{0}', space=vmem, size = 0x2000, scoped, tag = 'input window, operand 1']
    #allocation12 [shape = 's32[2]{0}', space=sflag, size = 0x8, scoped, tag = 'scoped memory for cross_attention.1']
    #allocation13 [shape = 'u8[16384]{0}', space=vmem, size = 0x4000, scoped, tag = 'input window, operand 2, single buffered']
    #allocation14 [shape = 'u8[8192]{0}', space=vmem, size = 0x2000, scoped, tag = 'input window, operand 3, single buffered']
    #allocation15 [shape = 's32[1]{0}', space=sflag, size = 0x4, scoped, tag = 'scoped memory for cross_attention.1']
    #allocation16 [shape = 'u8[16384]{0}', space=vmem, size = 0x4000, scoped, tag = 'input window, operand 4, single buffered']
    #allocation17 [shape = 'u8[8192]{0}', space=vmem, size = 0x2000, scoped, tag = 'output window, operand 0']
    %10 = vsyncpa [#allocation9], 0
    %s11 = scalar_lea.sflag [#allocation9], 1
    %12 = vsyncpa %s11, 0
    %13 = vsyncpa [#allocation12], 0
    %s14 = scalar_lea.sflag [#allocation12], 1
    %15 = vsyncpa %s14, 0
    %16 = vsyncpa [#allocation15], 0
    %17 = vsyncpa [#allocation10], 0
    %s18 = scalar_lea.sflag [#allocation10], 1
    %19 = vsyncpa %s18, 0
    loop: start=0, step=1, limit=6
    $region2: #{cross_attention.1} parent=1 // loop_pre_header
      _
    $region3: #{cross_attention.1} parent=1 // loop_header
      %s21 = sphi 0, %s25
      %p22 = scmp.ge.s32.totalorder %s21, 6
      %s28 = sphi 0, %s47
      %s29 = sphi 0, %s43
      %s30 = sphi 0, %s39
      %s31 = sphi 0, %s28
      %s32 = sphi 0, %s29
      %s33 = sphi 0, %s30
      %s34 = sphi 0, %s31
      %s35 = sphi 0, %s32
      %s36 = sphi 0, %s33
      %s52 = sphi 0, %s54
      %s55 = sphi 0, %s52
      %s56 = sphi 0, %s55
      %s72 = sphi 0, %s56
      %s80 = sphi 0, %s82
      %s83 = sphi 0, %s80
      %s84 = sphi 0, %s83
      %s100 = sphi 0, %s84
      %s104 = sphi 0, %s104
      %s106 = sphi 0, %s104
      %s107 = sphi 0, %s106
      %s121 = sphi 0, %s107
      %s125 = sphi 0, %s125
      %s127 = sphi 0, %s125
      %s128 = sphi 0, %s127
      %s142 = sphi 0, %s128
      %s146 = sphi 0, %s146
      %s148 = sphi 0, %s146
      %s149 = sphi 0, %s148
      %s163 = sphi 0, %s149
      %s171 = sphi 0, %s173
      %s174 = sphi 0, %s171
      %s175 = sphi 0, %s174
      %s191 = sphi 0, %s175
    $region4: #{cross_attention.1} parent=1 // loop_header_branch
      %24 = sbr.rel (%p22) target = $region8
    $region5: #{cross_attention.1} parent=1 // loop_body
      %s26 = ssub.s32 %s21, 1
      %s27 = ssub.s32 %s21, 2
      %s37 = sadd.s32 1, %s30
      %p38 = scmp.ge.s32.totalorder %s37, 2
      %s39 = scalar_select %p38, 0, %s37
      %s40 = sadd.s32 1, %s29
      %s41 = scalar_select %p38, %s40, %s29
      %p42 = scmp.ge.s32.totalorder %s41, 1
      %s43 = scalar_select %p42, 0, %s41
      %s44 = sadd.s32 1, %s28
      %s45 = scalar_select %p42, %s44, %s28
      %p46 = scmp.ge.s32.totalorder %s45, 2
      %s47 = scalar_select %p46, 0, %s45
      %s48 = ssub.s32 %s28, %s47
      %s49 = ssub.s32 %s29, %s43
      %s50 = sor.u32 %s48, %s49
      %p51 = scmp.eq.s32.totalorder %s50, 0
      %s53 = sadd.s32 %s52, 1
      %s54 = scalar_select %p51, %s52, %s53
      %p57 = pneg %p51
      %p58 = scmp.eq.s32.totalorder %s21, 3
      %p59 = por %p57, %p58
      %p60 = scmp.ne.s32.totalorder %s52, %s55
      %p61 = scmp.eq.s32.totalorder %s21, 0
      %p62 = por %p60, %p61
      %p63 = scmp.ne.s32.totalorder %s52, %s55
      %p64 = scmp.eq.s32.totalorder %s26, 3
      %p65 = por %p63, %p64
      %p66 = scmp.ne.s32.totalorder %s55, %s56
      %p67 = scmp.eq.s32.totalorder %s26, 0
      %p68 = por %p66, %p67
      %p69 = scmp.ne.s32.totalorder %s55, %s56
      %p70 = scmp.eq.s32.totalorder %s27, 3
      %p71 = por %p69, %p70
      %p73 = scmp.ne.s32.totalorder %s56, %s72
      %p74 = scmp.eq.s32.totalorder %s27, 0
      %p75 = por %p73, %p74
      %s76 = ssub.s32 %s28, %s47
      %s77 = ssub.s32 %s30, %s39
      %s78 = sor.u32 %s76, %s77
      %p79 = scmp.eq.s32.totalorder %s78, 0
      %s81 = sadd.s32 %s80, 1
      %s82 = scalar_select %p79, %s80, %s81
      %p85 = pneg %p79
      %p86 = scmp.eq.s32.totalorder %s21, 3
      %p87 = por %p85, %p86
      %p88 = scmp.ne.s32.totalorder %s80, %s83
      %p89 = scmp.eq.s32.totalorder %s21, 0
      %p90 = por %p88, %p89
      %p91 = scmp.ne.s32.totalorder %s80, %s83
      %p92 = scmp.eq.s32.totalorder %s26, 3
      %p93 = por %p91, %p92
      %p94 = scmp.ne.s32.totalorder %s83, %s84
      %p95 = scmp.eq.s32.totalorder %s26, 0
      %p96 = por %p94, %p95
      %p97 = scmp.ne.s32.totalorder %s83, %s84
      %p98 = scmp.eq.s32.totalorder %s27, 3
      %p99 = por %p97, %p98
      %p101 = scmp.ne.s32.totalorder %s84, %s100
      %p102 = scmp.eq.s32.totalorder %s27, 0
      %p103 = por %p101, %p102
      %s105 = sadd.s32 %s104, 1
      %p108 = scmp.eq.s32.totalorder %s21, 3
      %p109 = scmp.ne.s32.totalorder %s104, %s106
      %p110 = scmp.eq.s32.totalorder %s21, 0
      %p111 = por %p109, %p110
      %p112 = scmp.ne.s32.totalorder %s104, %s106
      %p113 = scmp.eq.s32.totalorder %s26, 3
      %p114 = por %p112, %p113
      %p115 = scmp.ne.s32.totalorder %s106, %s107
      %p116 = scmp.eq.s32.totalorder %s26, 0
      %p117 = por %p115, %p116
      %p118 = scmp.ne.s32.totalorder %s106, %s107
      %p119 = scmp.eq.s32.totalorder %s27, 3
      %p120 = por %p118, %p119
      %p122 = scmp.ne.s32.totalorder %s107, %s121
      %p123 = scmp.eq.s32.totalorder %s27, 0
      %p124 = por %p122, %p123
      %s126 = sadd.s32 %s125, 1
      %p129 = scmp.eq.s32.totalorder %s21, 3
      %p130 = scmp.ne.s32.totalorder %s125, %s127
      %p131 = scmp.eq.s32.totalorder %s21, 0
      %p132 = por %p130, %p131
      %p133 = scmp.ne.s32.totalorder %s125, %s127
      %p134 = scmp.eq.s32.totalorder %s26, 3
      %p135 = por %p133, %p134
      %p136 = scmp.ne.s32.totalorder %s127, %s128
      %p137 = scmp.eq.s32.totalorder %s26, 0
      %p138 = por %p136, %p137
      %p139 = scmp.ne.s32.totalorder %s127, %s128
      %p140 = scmp.eq.s32.totalorder %s27, 3
      %p141 = por %p139, %p140
      %p143 = scmp.ne.s32.totalorder %s128, %s142
      %p144 = scmp.eq.s32.totalorder %s27, 0
      %p145 = por %p143, %p144
      %s147 = sadd.s32 %s146, 1
      %p150 = scmp.eq.s32.totalorder %s21, 3
      %p151 = scmp.ne.s32.totalorder %s146, %s148
      %p152 = scmp.eq.s32.totalorder %s21, 0
      %p153 = por %p151, %p152
      %p154 = scmp.ne.s32.totalorder %s146, %s148
      %p155 = scmp.eq.s32.totalorder %s26, 3
      %p156 = por %p154, %p155
      %p157 = scmp.ne.s32.totalorder %s148, %s149
      %p158 = scmp.eq.s32.totalorder %s26, 0
      %p159 = por %p157, %p158
      %p160 = scmp.ne.s32.totalorder %s148, %s149
      %p161 = scmp.eq.s32.totalorder %s27, 3
      %p162 = por %p160, %p161
      %p164 = scmp.ne.s32.totalorder %s149, %s163
      %p165 = scmp.eq.s32.totalorder %s27, 0
      %p166 = por %p164, %p165
      %s167 = ssub.s32 %s28, %s47
      %s168 = ssub.s32 %s29, %s43
      %s169 = sor.u32 %s167, %s168
      %p170 = scmp.eq.s32.totalorder %s169, 0
      %s172 = sadd.s32 %s171, 1
      %s173 = scalar_select %p170, %s171, %s172
      %p176 = pneg %p170
      %p177 = scmp.eq.s32.totalorder %s21, 3
      %p178 = por %p176, %p177
      %p179 = scmp.ne.s32.totalorder %s171, %s174
      %p180 = scmp.eq.s32.totalorder %s21, 0
      %p181 = por %p179, %p180
      %p182 = scmp.ne.s32.totalorder %s171, %s174
      %p183 = scmp.eq.s32.totalorder %s26, 3
      %p184 = por %p182, %p183
      %p185 = scmp.ne.s32.totalorder %s174, %s175
      %p186 = scmp.eq.s32.totalorder %s26, 0
      %p187 = por %p185, %p186
      %p188 = scmp.ne.s32.totalorder %s174, %s175
      %p189 = scmp.eq.s32.totalorder %s27, 3
      %p190 = por %p188, %p189
      %p192 = scmp.ne.s32.totalorder %s175, %s191
      %p193 = scmp.eq.s32.totalorder %s27, 0
      %p194 = por %p192, %p193
      %p195 = scmp.le.s32.totalorder 1, %s21
      %p196 = scmp.lt.s32.totalorder %s21, 5
      %p197 = pnand %p195, %p196
      %p198 = pneg %p197
      // Predicated region
      $region9: #{cross_attention.1} parent=5 // pred_check
        _
      $region10: #{cross_attention.1} parent=5 // pred_check_branch
        %200 = sbr.rel (%p197) target = $region12
      $region11: #{cross_attention.1} parent=5 // pred_region
        %s201 = ssub.s32 %s21, 1
        // Predicated region
        $region13: #{cross_attention.1} parent=11 // pred_check
          %p202 = pneg %p117
        $region14: #{cross_attention.1} parent=11 // pred_check_branch
          %204 = sbr.rel (%p202) target = $region16
        $region15: #{cross_attention.1} parent=11 // pred_region
          %s206 = ssub.s32 512, 512
          %207 = vsyncadd [#allocation12], %s206
          %s208 = sshll.u32 [#allocation13], 4
          %s209 = int_to_ptr.vmem [resolvable:$true] %s208
          %214 = dma.hbm_to_vmem [thread:$0]  %s2, 512, %s209, [#allocation12], 128, 128, 8
        $region16: #{cross_attention.1} parent=11 // pred_fallthru
          _
        // Predicated region
        $region17: #{cross_attention.1} parent=11 // pred_check
          %p215 = pneg %p138
        $region18: #{cross_attention.1} parent=11 // pred_check_branch
          %217 = sbr.rel (%p215) target = $region20
        $region19: #{cross_attention.1} parent=11 // pred_region
          %s219 = ssub.s32 256, 256
          %220 = vsyncadd [#allocation15], %s219
          %s221 = sshll.u32 [#allocation14], 4
          %s222 = int_to_ptr.vmem [resolvable:$true] %s221
          %227 = dma.hbm_to_vmem [thread:$0]  %s3, 256, %s222, [#allocation15], 128, 128, 8
        $region20: #{cross_attention.1} parent=11 // pred_fallthru
          _
        // Predicated region
        $region21: #{cross_attention.1} parent=11 // pred_check
          %p228 = pneg %p159
        $region22: #{cross_attention.1} parent=11 // pred_check_branch
          %230 = sbr.rel (%p228) target = $region24
        $region23: #{cross_attention.1} parent=11 // pred_region
          %s232 = ssub.s32 512, 512
          %233 = vsyncadd [#allocation15], %s232
          %s234 = sshll.u32 [#allocation16], 4
          %s235 = int_to_ptr.vmem [resolvable:$true] %s234
          %240 = dma.hbm_to_vmem [thread:$0]  %s4, 512, %s235, [#allocation15], 128, 128, 8
        $region24: #{cross_attention.1} parent=11 // pred_fallthru
          _
      $region12: #{cross_attention.1} parent=5 // pred_fallthru
        _
      %p241 = scmp.lt.s32.totalorder %s21, 4
      // Predicated region
      $region25: #{cross_attention.1} parent=5 // pred_check
        %p242 = pneg %p241
      $region26: #{cross_attention.1} parent=5 // pred_check_branch
        %244 = sbr.rel (%p242) target = $region28
      $region27: #{cross_attention.1} parent=5 // pred_region
        // Predicated region
        $region29: #{cross_attention.1} parent=27 // pred_check
          %p245 = pneg %p62
        $region30: #{cross_attention.1} parent=27 // pred_check_branch
          %247 = sbr.rel (%p245) target = $region32
        $region31: #{cross_attention.1} parent=27 // pred_region
          %s248 = sand.u32 %s52, 1
          %s249 = scalar_lea.sflag [#allocation9], %s248
          %s250 = sand.u32 %s52, 1
          %s251 = smul.addr %s250, 8
          %s252 = scalar_lea.vmem [#allocation8], %s251
          %s254 = ssub.s32 128, 128
          %255 = vsyncadd %s249, %s254
          %s256 = sadd.s32 %s29, %s28
          %s257 = smul.addr %s256, 128
          %s258 = scalar_lea.hbm %s0, %s257
          %s260 = sshll.u32 %s252, 4
          %s261 = int_to_ptr.vmem [resolvable:$true] %s260
          %263 = dma.hbm_to_vmem [thread:$0]  %s258, 128, %s261, %s249
        $region32: #{cross_attention.1} parent=27 // pred_fallthru
          _
        // Predicated region
        $region33: #{cross_attention.1} parent=27 // pred_check
          %p264 = pneg %p90
        $region34: #{cross_attention.1} parent=27 // pred_check_branch
          %266 = sbr.rel (%p264) target = $region36
        $region35: #{cross_attention.1} parent=27 // pred_region
          %s267 = sand.u32 %s21, 1
          %s268 = scalar_lea.sflag [#allocation12], %s267
          %s269 = sand.u32 %s80, 1
          %s270 = smul.addr %s269, 8
          %s271 = scalar_lea.vmem [#allocation11], %s270
          %s273 = ssub.s32 128, 128
          %274 = vsyncadd %s268, %s273
          %s275 = smul.addr %s28, 2
          %s276 = sadd.s32 %s30, %s275
          %s277 = smul.addr %s276, 128
          %s278 = scalar_lea.hbm %s1, %s277
          %s280 = sshll.u32 %s271, 4
          %s281 = int_to_ptr.vmem [resolvable:$true] %s280
          %283 = dma.hbm_to_vmem [thread:$0]  %s278, 128, %s281, %s268
        $region36: #{cross_attention.1} parent=27 // pred_fallthru
          _
      $region28: #{cross_attention.1} parent=5 // pred_fallthru
        _
      %p284 = scmp.le.s32.totalorder 1, %s21
      %p285 = scmp.lt.s32.totalorder %s21, 5
      %p286 = pnand %p284, %p285
      %p287 = pneg %p286
      // Predicated region
      $region37: #{cross_attention.1} parent=5 // pred_check
        _
      $region38: #{cross_attention.1} parent=5 // pred_check_branch
        %289 = sbr.rel (%p286) target = $region40
      $region39: #{cross_attention.1} parent=5 // pred_region
        %s290 = ssub.s32 %s21, 1
        %s291 = sand.u32 %s55, 1
        %s292 = scalar_lea.sflag [#allocation9], %s291
        %s293 = sand.u32 %s55, 1
        %s294 = smul.addr %s293, 8
        %s295 = scalar_lea.vmem [#allocation8], %s294
        // Predicated region
        $region41: #{cross_attention.1} parent=39 // pred_check
          %p296 = pneg %p68
        $region42: #{cross_attention.1} parent=39 // pred_check_branch
          %298 = sbr.rel (%p296) target = $region44
        $region43: #{cross_attention.1} parent=39 // pred_region
          %299 = dma.done %s292, 128
        $region44: #{cross_attention.1} parent=39 // pred_fallthru
          _
        %s300 = sand.u32 %s26, 1
        %s301 = scalar_lea.sflag [#allocation12], %s300
        %s302 = sand.u32 %s83, 1
        %s303 = smul.addr %s302, 8
        %s304 = scalar_lea.vmem [#allocation11], %s303
        // Predicated region
        $region45: #{cross_attention.1} parent=39 // pred_check
          %p305 = pneg %p96
        $region46: #{cross_attention.1} parent=39 // pred_check_branch
          %307 = sbr.rel (%p305) target = $region48
        $region47: #{cross_attention.1} parent=39 // pred_region
          %308 = dma.done %s301, 128
        $region48: #{cross_attention.1} parent=39 // pred_fallthru
          _
        // Predicated region
        $region49: #{cross_attention.1} parent=39 // pred_check
          %p309 = pneg %p117
        $region50: #{cross_attention.1} parent=39 // pred_check_branch
          %311 = sbr.rel (%p309) target = $region52
        $region51: #{cross_attention.1} parent=39 // pred_region
          %312 = dma.done [#allocation12], 512
        $region52: #{cross_attention.1} parent=39 // pred_fallthru
          _
        // Predicated region
        $region53: #{cross_attention.1} parent=39 // pred_check
          %p313 = pneg %p138
        $region54: #{cross_attention.1} parent=39 // pred_check_branch
          %315 = sbr.rel (%p313) target = $region56
        $region55: #{cross_attention.1} parent=39 // pred_region
          %316 = dma.done [#allocation15], 256
        $region56: #{cross_attention.1} parent=39 // pred_fallthru
          _
        // Predicated region
        $region57: #{cross_attention.1} parent=39 // pred_check
          %p317 = pneg %p159
        $region58: #{cross_attention.1} parent=39 // pred_check_branch
          %319 = sbr.rel (%p317) target = $region60
        $region59: #{cross_attention.1} parent=39 // pred_region
          %320 = dma.done [#allocation15], 512
        $region60: #{cross_attention.1} parent=39 // pred_fallthru
          _
        %s321 = sand.u32 %s55, 1
        %s322 = scalar_lea.sflag [#allocation9], %s321
        %s323 = sand.u32 %s55, 1
        %s324 = smul.addr %s323, 8
        %s325 = scalar_lea.vmem [#allocation8], %s324
        %p326 = pneg %p68
        %p327 = pneg %p65
        %s328 = sand.u32 %s26, 1
        %s329 = scalar_lea.sflag [#allocation12], %s328
        %s330 = sand.u32 %s83, 1
        %s331 = smul.addr %s330, 8
        %s332 = scalar_lea.vmem [#allocation11], %s331
        %p333 = pneg %p96
        %p334 = pneg %p93
        %p335 = pneg %p117
        %p336 = pneg %p114
        %p337 = pneg %p138
        %p338 = pneg %p135
        %p339 = pneg %p159
        %p340 = pneg %p156
        %p341 = pneg %p187
        %p342 = pneg %p184
        %s343 = sand.u32 %s174, 1
        %s344 = scalar_lea.sflag [#allocation10], %s343
        %s345 = sand.u32 %s174, 1
        %s346 = smul.addr %s345, 8
        %s347 = scalar_lea.vmem [#allocation17], %s346
        %v348 = vld [vmem:[%s304] sm:$0xff]
        %v349 = vld [vmem:[#allocation14] sm:$0xff]
        %v350 = vld [vmem:[#allocation14 + $0x8] sm:$0xff]
        %vm351 = vcmask 130048
        %v353 = vsel %vm351, %v348, 0
        %355 = vmatprep.subr.mxu0 0.0
        %356 = vmatpush1.msra.mxu0 %v349
        %357 = vmatprep.subr.mxu0 0.0
        %358 = vmatpush1.msra.mxu0 %v350
        %359 = vmatprep.subr.mxu0 0.0
        %360 = vmatpush1.msra.mxu0 0.0
        %361 = vmatprep.subr.mxu0 0.0
        %362 = vmatpush1.msra.mxu0 0.0
        %363 = vmatprep.subr.mxu0 0.0
        %364 = vmatpush1.msra.mxu0 0.0
        %365 = vmatprep.subr.mxu0 0.0
        %366 = vmatpush1.msra.mxu0 0.0
        %367 = vmatprep.subr.mxu0 0.0
        %368 = vmatpush1.msra.mxu0 0.0
        %369 = vmatprep.subr.mxu0 0.0
        %370 = vmatpush1.msra.mxu0 0.0
        %371 = vmatprep.subr.mxu0 0.0
        %372 = vmatpush1.msra.mxu0 0.0
        %373 = vmatprep.subr.mxu0 0.0
        %374 = vmatpush1.msra.mxu0 0.0
        %375 = vmatprep.subr.mxu0 0.0
        %376 = vmatpush1.msra.mxu0 0.0
        %377 = vmatprep.subr.mxu0 0.0
        %378 = vmatpush1.msra.mxu0 0.0
        %379 = vmatprep.subr.mxu0 0.0
        %380 = vmatpush1.msra.mxu0 0.0
        %381 = vmatprep.subr.mxu0 0.0
        %382 = vmatpush1.msra.mxu0 0.0
        %383 = vmatprep.subr.mxu0 0.0
        %384 = vmatpush1.msra.mxu0 0.0
        %385 = vmatprep.subr.mxu0 0.0
        %386 = vmatpush1.msra.mxu0 0.0
        %387 = vmatprep.subr.mxu0 0.0
        %388 = vmatpush1.msra.mxu0 0.0
        %389 = vmatprep.subr.mxu0 0.0
        %390 = vmatpush1.msra.mxu0 0.0
        %391 = vmatprep.subr.mxu0 0.0
        %392 = vmatpush1.msra.mxu0 0.0
        %393 = vmatprep.subr.mxu0 0.0
        %394 = vmatpush1.msra.mxu0 0.0
        %395 = vmatprep.subr.mxu0 0.0
        %396 = vmatpush1.msra.mxu0 0.0
        %397 = vmatprep.subr.mxu0 0.0
        %398 = vmatpush1.msra.mxu0 0.0
        %399 = vmatprep.subr.mxu0 0.0
        %400 = vmatpush1.msra.mxu0 0.0
        %401 = vmatprep.subr.mxu0 0.0
        %402 = vmatpush1.msra.mxu0 0.0
        %403 = vmatprep.subr.mxu0 0.0
        %404 = vmatpush1.msra.mxu0 0.0
        %405 = vmatprep.subr.mxu0 0.0
        %406 = vmatpush1.msra.mxu0 0.0
        %407 = vmatprep.subr.mxu0 0.0
        %408 = vmatpush1.msra.mxu0 0.0
        %409 = vmatprep.subr.mxu0 0.0
        %410 = vmatpush1.msra.mxu0 0.0
        %411 = vmatprep.subr.mxu0 0.0
        %412 = vmatpush1.msra.mxu0 0.0
        %413 = vmatprep.subr.mxu0 0.0
        %414 = vmatpush1.msra.mxu0 0.0
        %415 = vmatprep.subr.mxu0 0.0
        %416 = vmatpush1.msra.mxu0 0.0
        %417 = vmatprep.subr.mxu0 0.0
        %418 = vmatpush1.msra.mxu0 0.0
        %419 = vmatprep.mubr.f32.mxu0 0.0
        %420 = vmatmul.mubr.f32.gmra.mrb[0].mxu0 %v353
        %v421 = vpop.f32.mrb[0].mxu0
        %v422 = vadd.f32 0.0, %v421
        %v423 = vpop.f32.mrb[0].mxu0
        %424 = vdwg.mxu0
        %p425 = scmp.eq.s32.totalorder %s33, 0
        // Predicated region
        $region61: #{cross_attention.1} parent=39 // pred_check
          %p426 = pneg %p425
        $region62: #{cross_attention.1} parent=39 // pred_check_branch
          %428 = sbr.rel (%p426) target = $region64
        $region63: #{cross_attention.1} parent=39 // pred_region
          %v429 = vld [vmem:[%s295] sm:$0xff]
          %v430 = vld [vmem:[#allocation13] sm:$0xff]
          %v431 = vld [vmem:[#allocation13 + $0x8] sm:$0xff]
          %v432 = vld [vmem:[#allocation13 + $0x10] sm:$0xff]
          %v433 = vld [vmem:[#allocation13 + $0x18] sm:$0xff]
          %vm434 = vcmask 261120
          %v436 = vsel %vm434, %v429, 0
          %438 = vmatprep.subr.mxu0 0.0
          %439 = vmatpush1.msra.mxu0 %v430
          %440 = vmatprep.subr.mxu0 0.0
          %441 = vmatpush1.msra.mxu0 %v431
          %442 = vmatprep.subr.mxu0 0.0
          %443 = vmatpush1.msra.mxu0 %v432
          %444 = vmatprep.subr.mxu0 0.0
          %445 = vmatpush1.msra.mxu0 %v433
          %446 = vmatprep.subr.mxu0 0.0
          %447 = vmatpush1.msra.mxu0 0.0
          %448 = vmatprep.subr.mxu0 0.0
          %449 = vmatpush1.msra.mxu0 0.0
          %450 = vmatprep.subr.mxu0 0.0
          %451 = vmatpush1.msra.mxu0 0.0
          %452 = vmatprep.subr.mxu0 0.0
          %453 = vmatpush1.msra.mxu0 0.0
          %454 = vmatprep.subr.mxu0 0.0
          %455 = vmatpush1.msra.mxu0 0.0
          %456 = vmatprep.subr.mxu0 0.0
          %457 = vmatpush1.msra.mxu0 0.0
          %458 = vmatprep.subr.mxu0 0.0
          %459 = vmatpush1.msra.mxu0 0.0
          %460 = vmatprep.subr.mxu0 0.0
          %461 = vmatpush1.msra.mxu0 0.0
          %462 = vmatprep.subr.mxu0 0.0
          %463 = vmatpush1.msra.mxu0 0.0
          %464 = vmatprep.subr.mxu0 0.0
          %465 = vmatpush1.msra.mxu0 0.0
          %466 = vmatprep.subr.mxu0 0.0
          %467 = vmatpush1.msra.mxu0 0.0
          %468 = vmatprep.subr.mxu0 0.0
          %469 = vmatpush1.msra.mxu0 0.0
          %470 = vmatprep.subr.mxu0 0.0
          %471 = vmatpush1.msra.mxu0 0.0
          %472 = vmatprep.subr.mxu0 0.0
          %473 = vmatpush1.msra.mxu0 0.0
          %474 = vmatprep.subr.mxu0 0.0
          %475 = vmatpush1.msra.mxu0 0.0
          %476 = vmatprep.subr.mxu0 0.0
          %477 = vmatpush1.msra.mxu0 0.0
          %478 = vmatprep.subr.mxu0 0.0
          %479 = vmatpush1.msra.mxu0 0.0
          %480 = vmatprep.subr.mxu0 0.0
          %481 = vmatpush1.msra.mxu0 0.0
          %482 = vmatprep.subr.mxu0 0.0
          %483 = vmatpush1.msra.mxu0 0.0
          %484 = vmatprep.subr.mxu0 0.0
          %485 = vmatpush1.msra.mxu0 0.0
          %486 = vmatprep.subr.mxu0 0.0
          %487 = vmatpush1.msra.mxu0 0.0
          %488 = vmatprep.subr.mxu0 0.0
          %489 = vmatpush1.msra.mxu0 0.0
          %490 = vmatprep.subr.mxu0 0.0
          %491 = vmatpush1.msra.mxu0 0.0
          %492 = vmatprep.subr.mxu0 0.0
          %493 = vmatpush1.msra.mxu0 0.0
          %494 = vmatprep.subr.mxu0 0.0
          %495 = vmatpush1.msra.mxu0 0.0
          %496 = vmatprep.subr.mxu0 0.0
          %497 = vmatpush1.msra.mxu0 0.0
          %498 = vmatprep.subr.mxu0 0.0
          %499 = vmatpush1.msra.mxu0 0.0
          %500 = vmatprep.subr.mxu0 0.0
          %501 = vmatpush1.msra.mxu0 0.0
          %502 = vmatprep.mubr.f32.mxu0 0.0
          %503 = vmatmul.mubr.f32.gmra.mrb[0].mxu0 %v436
          %v504 = vpop.f32.mrb[0].mxu0
          %v505 = vadd.f32 0.0, %v504
          %v506 = vpop.f32.mrb[0].mxu0
          %507 = vdwg.mxu0
          %v508 = vmul.f32 %v505, 0.35355338
          %vm509 = vcmask 64512
          %510 = vst.msk [vmem:[#allocation2] sm:$0xff] %vm509, %v508
          %512 = vrot.lane.b32.xlu0 %v508, 120
          %v513 = vpop.permute.xlu0 %512
          %s515 = scalar_lea.vmem [#allocation2], 8
          %516 = vst.msk [vmem:[%s515] sm:$0xff] %vm509, %v513
          %517 = vrot.lane.b32.xlu0 %v508, 112
          %v518 = vpop.permute.xlu0 %517
          %s520 = scalar_lea.vmem [#allocation2], 16
          %521 = vst.msk [vmem:[%s520] sm:$0xff] %vm509, %v518
          %522 = vrot.lane.b32.xlu0 %v508, 104
          %v523 = vpop.permute.xlu0 %522
          %s525 = scalar_lea.vmem [#allocation2], 24
          %526 = vst.msk [vmem:[%s525] sm:$0xff] %vm509, %v523
          %527 = vst.msk [vmem:[#allocation5] sm:$0xff] %vm509, 0.0
          %528 = vst.msk [vmem:[#allocation5 + $0x8] sm:$0xff] %vm509, 0.0
          %529 = vst.msk [vmem:[#allocation5 + $0x10] sm:$0xff] %vm509, 0.0
          %530 = vst.msk [vmem:[#allocation5 + $0x18] sm:$0xff] %vm509, 0.0
          %vm531 = vcmask 7168
          %532 = vst.msk [vmem:[#allocation6] sm:$0xff] %vm531, -inf
          %533 = vst.msk [vmem:[#allocation6 + $0x8] sm:$0xff] %vm531, -inf
          %534 = vst.msk [vmem:[#allocation6 + $0x10] sm:$0xff] %vm531, -inf
          %535 = vst.msk [vmem:[#allocation6 + $0x18] sm:$0xff] %vm531, -inf
          %536 = vst.msk [vmem:[#allocation7] sm:$0xff] %vm531, 0.0
          %537 = vst.msk [vmem:[#allocation7 + $0x8] sm:$0xff] %vm531, 0.0
          %538 = vst.msk [vmem:[#allocation7 + $0x10] sm:$0xff] %vm531, 0.0
          %539 = vst.msk [vmem:[#allocation7 + $0x18] sm:$0xff] %vm531, 0.0
        $region64: #{cross_attention.1} parent=39 // pred_fallthru
          _
        %vm540 = vcmask 64512
        %541 = vst.msk [vmem:[#allocation3] sm:$0xff] %vm540, %v422
        %543 = vrot.lane.b32.xlu0 %v422, 96
        %v544 = vpop.permute.xlu0 %543
        %546 = vst.msk [vmem:[#allocation4] sm:$0xff] %vm540, %v544
        %547 = vrot.lane.b32.xlu0 %v422, 120
        %v548 = vpop.permute.xlu0 %547
        %s550 = scalar_lea.vmem [#allocation3], 8
        %551 = vst.msk [vmem:[%s550] sm:$0xff] %vm540, %v548
        %552 = vrot.lane.b32.xlu0 %v422, 88
        %v553 = vpop.permute.xlu0 %552
        %s555 = scalar_lea.vmem [#allocation4], 8
        %556 = vst.msk [vmem:[%s555] sm:$0xff] %vm540, %v553
        %557 = vrot.lane.b32.xlu0 %v422, 112
        %v558 = vpop.permute.xlu0 %557
        %s560 = scalar_lea.vmem [#allocation3], 16
        %561 = vst.msk [vmem:[%s560] sm:$0xff] %vm540, %v558
        %562 = vrot.lane.b32.xlu0 %v422, 80
        %v563 = vpop.permute.xlu0 %562
        %s565 = scalar_lea.vmem [#allocation4], 16
        %566 = vst.msk [vmem:[%s565] sm:$0xff] %vm540, %v563
        %567 = vrot.lane.b32.xlu0 %v422, 104
        %v568 = vpop.permute.xlu0 %567
        %s570 = scalar_lea.vmem [#allocation3], 24
        %571 = vst.msk [vmem:[%s570] sm:$0xff] %vm540, %v568
        %572 = vrot.lane.b32.xlu0 %v422, 72
        %v573 = vpop.permute.xlu0 %572
        %s575 = scalar_lea.vmem [#allocation4], 24
        %576 = vst.msk [vmem:[%s575] sm:$0xff] %vm540, %v573
        %v577 = vld [vmem:[#allocation2] sm:$0xff]
        %v578 = vld [vmem:[#allocation2 + $0x8] sm:$0xff]
        %v579 = vld [vmem:[#allocation2 + $0x10] sm:$0xff]
        %v580 = vld [vmem:[#allocation2 + $0x18] sm:$0xff]
        %v581 = vld [vmem:[#allocation3] sm:$0xff]
        %v582 = vld [vmem:[#allocation3 + $0x8] sm:$0xff]
        %v583 = vld [vmem:[#allocation3 + $0x10] sm:$0xff]
        %v584 = vld [vmem:[#allocation3 + $0x18] sm:$0xff]
        %v585 = vld [vmem:[#allocation4] sm:$0xff]
        %v586 = vld [vmem:[#allocation4 + $0x8] sm:$0xff]
        %v587 = vld [vmem:[#allocation4 + $0x10] sm:$0xff]
        %v588 = vld [vmem:[#allocation4 + $0x18] sm:$0xff]
        %v590 = vsel %vm540, %v577, 0
        %v593 = vsel %vm540, %v581, 0
        %595 = vmatprep.subr.mxu0 0.0
        %596 = vmatpush1.xpose.msra.mxu0 %v593
        %597 = vmatprep.subr.mxu0 0.0
        %598 = vmatpush1.xpose.msra.mxu0 0.0
        %599 = vmatprep.subr.mxu0 0.0
        %600 = vmatpush1.xpose.msra.mxu0 0.0
        %601 = vmatprep.subr.mxu0 0.0
        %602 = vmatpush1.xpose.msra.mxu0 0.0
        %603 = vmatprep.subr.mxu0 0.0
        %604 = vmatpush1.xpose.msra.mxu0 0.0
        %605 = vmatprep.subr.mxu0 0.0
        %606 = vmatpush1.xpose.msra.mxu0 0.0
        %607 = vmatprep.subr.mxu0 0.0
        %608 = vmatpush1.xpose.msra.mxu0 0.0
        %609 = vmatprep.subr.mxu0 0.0
        %610 = vmatpush1.xpose.msra.mxu0 0.0
        %611 = vmatprep.subr.mxu0 0.0
        %612 = vmatpush1.xpose.msra.mxu0 0.0
        %613 = vmatprep.subr.mxu0 0.0
        %614 = vmatpush1.xpose.msra.mxu0 0.0
        %615 = vmatprep.subr.mxu0 0.0
        %616 = vmatpush1.xpose.msra.mxu0 0.0
        %617 = vmatprep.subr.mxu0 0.0
        %618 = vmatpush1.xpose.msra.mxu0 0.0
        %619 = vmatprep.subr.mxu0 0.0
        %620 = vmatpush1.xpose.msra.mxu0 0.0
        %621 = vmatprep.subr.mxu0 0.0
        %622 = vmatpush1.xpose.msra.mxu0 0.0
        %623 = vmatprep.subr.mxu0 0.0
        %624 = vmatpush1.xpose.msra.mxu0 0.0
        %625 = vmatprep.subr.mxu0 0.0
        %626 = vmatpush1.xpose.msra.mxu0 0.0
        %627 = vmatprep.subr.mxu0 0.0
        %628 = vmatpush1.xpose.msra.mxu0 0.0
        %629 = vmatprep.subr.mxu0 0.0
        %630 = vmatpush1.xpose.msra.mxu0 0.0
        %631 = vmatprep.subr.mxu0 0.0
        %632 = vmatpush1.xpose.msra.mxu0 0.0
        %633 = vmatprep.subr.mxu0 0.0
        %634 = vmatpush1.xpose.msra.mxu0 0.0
        %635 = vmatprep.subr.mxu0 0.0
        %636 = vmatpush1.xpose.msra.mxu0 0.0
        %637 = vmatprep.subr.mxu0 0.0
        %638 = vmatpush1.xpose.msra.mxu0 0.0
        %639 = vmatprep.subr.mxu0 0.0
        %640 = vmatpush1.xpose.msra.mxu0 0.0
        %641 = vmatprep.subr.mxu0 0.0
        %642 = vmatpush1.xpose.msra.mxu0 0.0
        %643 = vmatprep.subr.mxu0 0.0
        %644 = vmatpush1.xpose.msra.mxu0 0.0
        %645 = vmatprep.subr.mxu0 0.0
        %646 = vmatpush1.xpose.msra.mxu0 0.0
        %647 = vmatprep.subr.mxu0 0.0
        %648 = vmatpush1.xpose.msra.mxu0 0.0
        %649 = vmatprep.subr.mxu0 0.0
        %650 = vmatpush1.xpose.msra.mxu0 0.0
        %651 = vmatprep.subr.mxu0 0.0
        %652 = vmatpush1.xpose.msra.mxu0 0.0
        %653 = vmatprep.subr.mxu0 0.0
        %654 = vmatpush1.xpose.msra.mxu0 0.0
        %655 = vmatprep.subr.mxu0 0.0
        %656 = vmatpush1.xpose.msra.mxu0 0.0
        %657 = vmatprep.subr.mxu0 0.0
        %658 = vmatpush1.xpose.msra.mxu0 0.0
        %659 = vmatprep.mubr.f32.mxu0 0.0
        %660 = vmatmul.mubr.f32.gmra.mrb[0].mxu0 %v590
        %v661 = vpop.f32.mrb[0].mxu0
        %v662 = vadd.f32 0.0, %v661
        %v663 = vpop.f32.mrb[0].mxu0
        %664 = vdwg.mxu0
        %v666 = vsel %vm540, %v578, 0
        %v669 = vsel %vm540, %v582, 0
        %671 = vmatprep.subr.mxu0 0.0
        %672 = vmatpush1.xpose.msra.mxu0 %v669
        %673 = vmatprep.subr.mxu0 0.0
        %674 = vmatpush1.xpose.msra.mxu0 0.0
        %675 = vmatprep.subr.mxu0 0.0
        %676 = vmatpush1.xpose.msra.mxu0 0.0
        %677 = vmatprep.subr.mxu0 0.0
        %678 = vmatpush1.xpose.msra.mxu0 0.0
        %679 = vmatprep.subr.mxu0 0.0
        %680 = vmatpush1.xpose.msra.mxu0 0.0
        %681 = vmatprep.subr.mxu0 0.0
        %682 = vmatpush1.xpose.msra.mxu0 0.0
        %683 = vmatprep.subr.mxu0 0.0
        %684 = vmatpush1.xpose.msra.mxu0 0.0
        %685 = vmatprep.subr.mxu0 0.0
        %686 = vmatpush1.xpose.msra.mxu0 0.0
        %687 = vmatprep.subr.mxu0 0.0
        %688 = vmatpush1.xpose.msra.mxu0 0.0
        %689 = vmatprep.subr.mxu0 0.0
        %690 = vmatpush1.xpose.msra.mxu0 0.0
        %691 = vmatprep.subr.mxu0 0.0
        %692 = vmatpush1.xpose.msra.mxu0 0.0
        %693 = vmatprep.subr.mxu0 0.0
        %694 = vmatpush1.xpose.msra.mxu0 0.0
        %695 = vmatprep.subr.mxu0 0.0
        %696 = vmatpush1.xpose.msra.mxu0 0.0
        %697 = vmatprep.subr.mxu0 0.0
        %698 = vmatpush1.xpose.msra.mxu0 0.0
        %699 = vmatprep.subr.mxu0 0.0
        %700 = vmatpush1.xpose.msra.mxu0 0.0
        %701 = vmatprep.subr.mxu0 0.0
        %702 = vmatpush1.xpose.msra.mxu0 0.0
        %703 = vmatprep.subr.mxu0 0.0
        %704 = vmatpush1.xpose.msra.mxu0 0.0
        %705 = vmatprep.subr.mxu0 0.0
        %706 = vmatpush1.xpose.msra.mxu0 0.0
        %707 = vmatprep.subr.mxu0 0.0
        %708 = vmatpush1.xpose.msra.mxu0 0.0
        %709 = vmatprep.subr.mxu0 0.0
        %710 = vmatpush1.xpose.msra.mxu0 0.0
        %711 = vmatprep.subr.mxu0 0.0
        %712 = vmatpush1.xpose.msra.mxu0 0.0
        %713 = vmatprep.subr.mxu0 0.0
        %714 = vmatpush1.xpose.msra.mxu0 0.0
        %715 = vmatprep.subr.mxu0 0.0
        %716 = vmatpush1.xpose.msra.mxu0 0.0
        %717 = vmatprep.subr.mxu0 0.0
        %718 = vmatpush1.xpose.msra.mxu0 0.0
        %719 = vmatprep.subr.mxu0 0.0
        %720 = vmatpush1.xpose.msra.mxu0 0.0
        %721 = vmatprep.subr.mxu0 0.0
        %722 = vmatpush1.xpose.msra.mxu0 0.0
        %723 = vmatprep.subr.mxu0 0.0
        %724 = vmatpush1.xpose.msra.mxu0 0.0
        %725 = vmatprep.subr.mxu0 0.0
        %726 = vmatpush1.xpose.msra.mxu0 0.0
        %727 = vmatprep.subr.mxu0 0.0
        %728 = vmatpush1.xpose.msra.mxu0 0.0
        %729 = vmatprep.subr.mxu0 0.0
        %730 = vmatpush1.xpose.msra.mxu0 0.0
        %731 = vmatprep.subr.mxu0 0.0
        %732 = vmatpush1.xpose.msra.mxu0 0.0
        %733 = vmatprep.subr.mxu0 0.0
        %734 = vmatpush1.xpose.msra.mxu0 0.0
        %735 = vmatprep.mubr.f32.mxu0 0.0
        %736 = vmatmul.mubr.f32.gmra.mrb[0].mxu0 %v666
        %v737 = vpop.f32.mrb[0].mxu0
        %v738 = vadd.f32 0.0, %v737
        %v739 = vpop.f32.mrb[0].mxu0
        %740 = vdwg.mxu0
        %v742 = vsel %vm540, %v579, 0
        %v745 = vsel %vm540, %v583, 0
        %747 = vmatprep.subr.mxu0 0.0
        %748 = vmatpush1.xpose.msra.mxu0 %v745
        %749 = vmatprep.subr.mxu0 0.0
        %750 = vmatpush1.xpose.msra.mxu0 0.0
        %751 = vmatprep.subr.mxu0 0.0
        %752 = vmatpush1.xpose.msra.mxu0 0.0
        %753 = vmatprep.subr.mxu0 0.0
        %754 = vmatpush1.xpose.msra.mxu0 0.0
        %755 = vmatprep.subr.mxu0 0.0
        %756 = vmatpush1.xpose.msra.mxu0 0.0
        %757 = vmatprep.subr.mxu0 0.0
        %758 = vmatpush1.xpose.msra.mxu0 0.0
        %759 = vmatprep.subr.mxu0 0.0
        %760 = vmatpush1.xpose.msra.mxu0 0.0
        %761 = vmatprep.subr.mxu0 0.0
        %762 = vmatpush1.xpose.msra.mxu0 0.0
        %763 = vmatprep.subr.mxu0 0.0
        %764 = vmatpush1.xpose.msra.mxu0 0.0
        %765 = vmatprep.subr.mxu0 0.0
        %766 = vmatpush1.xpose.msra.mxu0 0.0
        %767 = vmatprep.subr.mxu0 0.0
        %768 = vmatpush1.xpose.msra.mxu0 0.0
        %769 = vmatprep.subr.mxu0 0.0
        %770 = vmatpush1.xpose.msra.mxu0 0.0
        %771 = vmatprep.subr.mxu0 0.0
        %772 = vmatpush1.xpose.msra.mxu0 0.0
        %773 = vmatprep.subr.mxu0 0.0
        %774 = vmatpush1.xpose.msra.mxu0 0.0
        %775 = vmatprep.subr.mxu0 0.0
        %776 = vmatpush1.xpose.msra.mxu0 0.0
        %777 = vmatprep.subr.mxu0 0.0
        %778 = vmatpush1.xpose.msra.mxu0 0.0
        %779 = vmatprep.subr.mxu0 0.0
        %780 = vmatpush1.xpose.msra.mxu0 0.0
        %781 = vmatprep.subr.mxu0 0.0
        %782 = vmatpush1.xpose.msra.mxu0 0.0
        %783 = vmatprep.subr.mxu0 0.0
        %784 = vmatpush1.xpose.msra.mxu0 0.0
        %785 = vmatprep.subr.mxu0 0.0
        %786 = vmatpush1.xpose.msra.mxu0 0.0
        %787 = vmatprep.subr.mxu0 0.0
        %788 = vmatpush1.xpose.msra.mxu0 0.0
        %789 = vmatprep.subr.mxu0 0.0
        %790 = vmatpush1.xpose.msra.mxu0 0.0
        %791 = vmatprep.subr.mxu0 0.0
        %792 = vmatpush1.xpose.msra.mxu0 0.0
        %793 = vmatprep.subr.mxu0 0.0
        %794 = vmatpush1.xpose.msra.mxu0 0.0
        %795 = vmatprep.subr.mxu0 0.0
        %796 = vmatpush1.xpose.msra.mxu0 0.0
        %797 = vmatprep.subr.mxu0 0.0
        %798 = vmatpush1.xpose.msra.mxu0 0.0
        %799 = vmatprep.subr.mxu0 0.0
        %800 = vmatpush1.xpose.msra.mxu0 0.0
        %801 = vmatprep.subr.mxu0 0.0
        %802 = vmatpush1.xpose.msra.mxu0 0.0
        %803 = vmatprep.subr.mxu0 0.0
        %804 = vmatpush1.xpose.msra.mxu0 0.0
        %805 = vmatprep.subr.mxu0 0.0
        %806 = vmatpush1.xpose.msra.mxu0 0.0
        %807 = vmatprep.subr.mxu0 0.0
        %808 = vmatpush1.xpose.msra.mxu0 0.0
        %809 = vmatprep.subr.mxu0 0.0
        %810 = vmatpush1.xpose.msra.mxu0 0.0
        %811 = vmatprep.mubr.f32.mxu0 0.0
        %812 = vmatmul.mubr.f32.gmra.mrb[0].mxu0 %v742
        %v813 = vpop.f32.mrb[0].mxu0
        %v814 = vadd.f32 0.0, %v813
        %v815 = vpop.f32.mrb[0].mxu0
        %816 = vdwg.mxu0
        %v818 = vsel %vm540, %v580, 0
        %v821 = vsel %vm540, %v584, 0
        %823 = vmatprep.subr.mxu0 0.0
        %824 = vmatpush1.xpose.msra.mxu0 %v821
        %825 = vmatprep.subr.mxu0 0.0
        %826 = vmatpush1.xpose.msra.mxu0 0.0
        %827 = vmatprep.subr.mxu0 0.0
        %828 = vmatpush1.xpose.msra.mxu0 0.0
        %829 = vmatprep.subr.mxu0 0.0
        %830 = vmatpush1.xpose.msra.mxu0 0.0
        %831 = vmatprep.subr.mxu0 0.0
        %832 = vmatpush1.xpose.msra.mxu0 0.0
        %833 = vmatprep.subr.mxu0 0.0
        %834 = vmatpush1.xpose.msra.mxu0 0.0
        %835 = vmatprep.subr.mxu0 0.0
        %836 = vmatpush1.xpose.msra.mxu0 0.0
        %837 = vmatprep.subr.mxu0 0.0
        %838 = vmatpush1.xpose.msra.mxu0 0.0
        %839 = vmatprep.subr.mxu0 0.0
        %840 = vmatpush1.xpose.msra.mxu0 0.0
        %841 = vmatprep.subr.mxu0 0.0
        %842 = vmatpush1.xpose.msra.mxu0 0.0
        %843 = vmatprep.subr.mxu0 0.0
        %844 = vmatpush1.xpose.msra.mxu0 0.0
        %845 = vmatprep.subr.mxu0 0.0
        %846 = vmatpush1.xpose.msra.mxu0 0.0
        %847 = vmatprep.subr.mxu0 0.0
        %848 = vmatpush1.xpose.msra.mxu0 0.0
        %849 = vmatprep.subr.mxu0 0.0
        %850 = vmatpush1.xpose.msra.mxu0 0.0
        %851 = vmatprep.subr.mxu0 0.0
        %852 = vmatpush1.xpose.msra.mxu0 0.0
        %853 = vmatprep.subr.mxu0 0.0
        %854 = vmatpush1.xpose.msra.mxu0 0.0
        %855 = vmatprep.subr.mxu0 0.0
        %856 = vmatpush1.xpose.msra.mxu0 0.0
        %857 = vmatprep.subr.mxu0 0.0
        %858 = vmatpush1.xpose.msra.mxu0 0.0
        %859 = vmatprep.subr.mxu0 0.0
        %860 = vmatpush1.xpose.msra.mxu0 0.0
        %861 = vmatprep.subr.mxu0 0.0
        %862 = vmatpush1.xpose.msra.mxu0 0.0
        %863 = vmatprep.subr.mxu0 0.0
        %864 = vmatpush1.xpose.msra.mxu0 0.0
        %865 = vmatprep.subr.mxu0 0.0
        %866 = vmatpush1.xpose.msra.mxu0 0.0
        %867 = vmatprep.subr.mxu0 0.0
        %868 = vmatpush1.xpose.msra.mxu0 0.0
        %869 = vmatprep.subr.mxu0 0.0
        %870 = vmatpush1.xpose.msra.mxu0 0.0
        %871 = vmatprep.subr.mxu0 0.0
        %872 = vmatpush1.xpose.msra.mxu0 0.0
        %873 = vmatprep.subr.mxu0 0.0
        %874 = vmatpush1.xpose.msra.mxu0 0.0
        %875 = vmatprep.subr.mxu0 0.0
        %876 = vmatpush1.xpose.msra.mxu0 0.0
        %877 = vmatprep.subr.mxu0 0.0
        %878 = vmatpush1.xpose.msra.mxu0 0.0
        %879 = vmatprep.subr.mxu0 0.0
        %880 = vmatpush1.xpose.msra.mxu0 0.0
        %881 = vmatprep.subr.mxu0 0.0
        %882 = vmatpush1.xpose.msra.mxu0 0.0
        %883 = vmatprep.subr.mxu0 0.0
        %884 = vmatpush1.xpose.msra.mxu0 0.0
        %885 = vmatprep.subr.mxu0 0.0
        %886 = vmatpush1.xpose.msra.mxu0 0.0
        %887 = vmatprep.mubr.f32.mxu0 0.0
        %888 = vmatmul.mubr.f32.gmra.mrb[0].mxu0 %v818
        %v889 = vpop.f32.mrb[0].mxu0
        %v890 = vadd.f32 0.0, %v889
        %v891 = vpop.f32.mrb[0].mxu0
        %892 = vdwg.mxu0
        %v893 = vld [vmem:[#allocation6] sm:$0xff]
        %v894 = vld [vmem:[#allocation6 + $0x8] sm:$0xff]
        %v895 = vld [vmem:[#allocation6 + $0x10] sm:$0xff]
        %v896 = vld [vmem:[#allocation6 + $0x18] sm:$0xff]
        %v897 = vsel %vm540, %v662, -inf
        %898 = vmax.xlane.f32.xlu0 %v897
        %v899 = vpop.xlane.xlu0 %898
        %v900 = vsel %vm540, %v738, -inf
        %901 = vmax.xlane.f32.xlu0 %v900
        %v902 = vpop.xlane.xlu0 %901
        %v903 = vsel %vm540, %v814, -inf
        %904 = vmax.xlane.f32.xlu0 %v903
        %v905 = vpop.xlane.xlu0 %904
        %v906 = vsel %vm540, %v890, -inf
        %907 = vmax.xlane.f32.xlu0 %v906
        %v908 = vpop.xlane.xlu0 %907
        %v909 = vmax.f32 %v893, %v899
        %v910 = vmax.f32 %v894, %v902
        %v911 = vmax.f32 %v895, %v905
        %v912 = vmax.f32 %v896, %v908
        %v913 = vsub.f32 %v893, %v909
        %v914 = vsub.f32 %v894, %v910
        %v915 = vsub.f32 %v895, %v911
        %v916 = vsub.f32 %v896, %v912
        %v917 = vmul.f32 %v913, 1.442695
        %v918 = vpow.pop %v917
        %v919 = vmul.f32 %v914, 1.442695
        %v920 = vpow.pop %v919
        %v921 = vmul.f32 %v915, 1.442695
        %v922 = vpow.pop %v921
        %v923 = vmul.f32 %v916, 1.442695
        %v924 = vpow.pop %v923
        %926 = vset.pattern.permute.xlu0 0
        %927 = vperm.xlu0 %926, %v909
        %v928 = vpop.permute.xlu0 %927
        %931 = vset.pattern.permute.xlu0 0
        %932 = vperm.xlu0 %931, %v910
        %v933 = vpop.permute.xlu0 %932
        %936 = vset.pattern.permute.xlu0 0
        %937 = vperm.xlu0 %936, %v911
        %v938 = vpop.permute.xlu0 %937
        %941 = vset.pattern.permute.xlu0 0
        %942 = vperm.xlu0 %941, %v912
        %v943 = vpop.permute.xlu0 %942
        %v945 = vsub.f32 %v662, %v928
        %v946 = vsub.f32 %v738, %v933
        %v947 = vsub.f32 %v814, %v938
        %v948 = vsub.f32 %v890, %v943
        %v949 = vmul.f32 %v945, 1.442695
        %v950 = vpow.pop %v949
        %v951 = vmul.f32 %v946, 1.442695
        %v952 = vpow.pop %v951
        %v953 = vmul.f32 %v947, 1.442695
        %v954 = vpow.pop %v953
        %v955 = vmul.f32 %v948, 1.442695
        %v956 = vpow.pop %v955
        %v957 = vld [vmem:[#allocation7] sm:$0xff]
        %v958 = vld [vmem:[#allocation7 + $0x8] sm:$0xff]
        %v959 = vld [vmem:[#allocation7 + $0x10] sm:$0xff]
        %v960 = vld [vmem:[#allocation7 + $0x18] sm:$0xff]
        %v961 = vmul.f32 %v918, %v957
        %v962 = vmul.f32 %v920, %v958
        %v963 = vmul.f32 %v922, %v959
        %v964 = vmul.f32 %v924, %v960
        %v965 = vsel %vm540, %v950, 0.0
        %966 = vadd.xlane.f32.xlu0 %v965
        %v967 = vpop.xlane.xlu0 %966
        %v968 = vsel %vm540, %v952, 0.0
        %969 = vadd.xlane.f32.xlu0 %v968
        %v970 = vpop.xlane.xlu0 %969
        %v971 = vsel %vm540, %v954, 0.0
        %972 = vadd.xlane.f32.xlu0 %v971
        %v973 = vpop.xlane.xlu0 %972
        %v974 = vsel %vm540, %v956, 0.0
        %975 = vadd.xlane.f32.xlu0 %v974
        %v976 = vpop.xlane.xlu0 %975
        %v977 = vadd.f32 %v961, %v967
        %v978 = vadd.f32 %v962, %v970
        %v979 = vadd.f32 %v963, %v973
        %v980 = vadd.f32 %v964, %v976
        %vm981 = vcmask 7168
        %982 = vst.msk [vmem:[#allocation7] sm:$0xff] %vm981, %v977
        %983 = vst.msk [vmem:[#allocation7 + $0x8] sm:$0xff] %vm981, %v978
        %984 = vst.msk [vmem:[#allocation7 + $0x10] sm:$0xff] %vm981, %v979
        %985 = vst.msk [vmem:[#allocation7 + $0x18] sm:$0xff] %vm981, %v980
        %v986 = vld [vmem:[#allocation5] sm:$0xff]
        %v987 = vld [vmem:[#allocation5 + $0x8] sm:$0xff]
        %v988 = vld [vmem:[#allocation5 + $0x10] sm:$0xff]
        %v989 = vld [vmem:[#allocation5 + $0x18] sm:$0xff]
        %991 = vset.pattern.permute.xlu0 0
        %992 = vperm.xlu0 %991, %v918
        %v993 = vpop.permute.xlu0 %992
        %996 = vset.pattern.permute.xlu0 0
        %997 = vperm.xlu0 %996, %v920
        %v998 = vpop.permute.xlu0 %997
        %1001 = vset.pattern.permute.xlu0 0
        %1002 = vperm.xlu0 %1001, %v922
        %v1003 = vpop.permute.xlu0 %1002
        %1006 = vset.pattern.permute.xlu0 0
        %1007 = vperm.xlu0 %1006, %v924
        %v1008 = vpop.permute.xlu0 %1007
        %v1010 = vmul.f32 %v993, %v986
        %v1011 = vmul.f32 %v998, %v987
        %v1012 = vmul.f32 %v1003, %v988
        %v1013 = vmul.f32 %v1008, %v989
        %v1015 = vsel %vm540, %v950, 0
        %1017 = vmatprep.subr.mxu0 0.0
        %1018 = vmatpush1.msra.mxu0 %v585
        %1019 = vmatprep.subr.mxu0 0.0
        %1020 = vmatpush1.msra.mxu0 0.0
        %1021 = vmatprep.subr.mxu0 0.0
        %1022 = vmatpush1.msra.mxu0 0.0
        %1023 = vmatprep.subr.mxu0 0.0
        %1024 = vmatpush1.msra.mxu0 0.0
        %1025 = vmatprep.subr.mxu0 0.0
        %1026 = vmatpush1.msra.mxu0 0.0
        %1027 = vmatprep.subr.mxu0 0.0
        %1028 = vmatpush1.msra.mxu0 0.0
        %1029 = vmatprep.subr.mxu0 0.0
        %1030 = vmatpush1.msra.mxu0 0.0
        %1031 = vmatprep.subr.mxu0 0.0
        %1032 = vmatpush1.msra.mxu0 0.0
        %1033 = vmatprep.subr.mxu0 0.0
        %1034 = vmatpush1.msra.mxu0 0.0
        %1035 = vmatprep.subr.mxu0 0.0
        %1036 = vmatpush1.msra.mxu0 0.0
        %1037 = vmatprep.subr.mxu0 0.0
        %1038 = vmatpush1.msra.mxu0 0.0
        %1039 = vmatprep.subr.mxu0 0.0
        %1040 = vmatpush1.msra.mxu0 0.0
        %1041 = vmatprep.subr.mxu0 0.0
        %1042 = vmatpush1.msra.mxu0 0.0
        %1043 = vmatprep.subr.mxu0 0.0
        %1044 = vmatpush1.msra.mxu0 0.0
        %1045 = vmatprep.subr.mxu0 0.0
        %1046 = vmatpush1.msra.mxu0 0.0
        %1047 = vmatprep.subr.mxu0 0.0
        %1048 = vmatpush1.msra.mxu0 0.0
        %1049 = vmatprep.subr.mxu0 0.0
        %1050 = vmatpush1.msra.mxu0 0.0
        %1051 = vmatprep.subr.mxu0 0.0
        %1052 = vmatpush1.msra.mxu0 0.0
        %1053 = vmatprep.subr.mxu0 0.0
        %1054 = vmatpush1.msra.mxu0 0.0
        %1055 = vmatprep.subr.mxu0 0.0
        %1056 = vmatpush1.msra.mxu0 0.0
        %1057 = vmatprep.subr.mxu0 0.0
        %1058 = vmatpush1.msra.mxu0 0.0
        %1059 = vmatprep.subr.mxu0 0.0
        %1060 = vmatpush1.msra.mxu0 0.0
        %1061 = vmatprep.subr.mxu0 0.0
        %1062 = vmatpush1.msra.mxu0 0.0
        %1063 = vmatprep.subr.mxu0 0.0
        %1064 = vmatpush1.msra.mxu0 0.0
        %1065 = vmatprep.subr.mxu0 0.0
        %1066 = vmatpush1.msra.mxu0 0.0
        %1067 = vmatprep.subr.mxu0 0.0
        %1068 = vmatpush1.msra.mxu0 0.0
        %1069 = vmatprep.subr.mxu0 0.0
        %1070 = vmatpush1.msra.mxu0 0.0
        %1071 = vmatprep.subr.mxu0 0.0
        %1072 = vmatpush1.msra.mxu0 0.0
        %1073 = vmatprep.subr.mxu0 0.0
        %1074 = vmatpush1.msra.mxu0 0.0
        %1075 = vmatprep.subr.mxu0 0.0
        %1076 = vmatpush1.msra.mxu0 0.0
        %1077 = vmatprep.subr.mxu0 0.0
        %1078 = vmatpush1.msra.mxu0 0.0
        %1079 = vmatprep.subr.mxu0 0.0
        %1080 = vmatpush1.msra.mxu0 0.0
        %1081 = vmatprep.mubr.f32.mxu0 0.0
        %1082 = vmatmul.mubr.f32.gmra.mrb[0].mxu0 %v1015
        %v1083 = vpop.f32.mrb[0].mxu0
        %v1084 = vadd.f32 0.0, %v1083
        %v1085 = vpop.f32.mrb[0].mxu0
        %1086 = vdwg.mxu0
        %v1088 = vsel %vm540, %v952, 0
        %1090 = vmatprep.subr.mxu0 0.0
        %1091 = vmatpush1.msra.mxu0 %v586
        %1092 = vmatprep.subr.mxu0 0.0
        %1093 = vmatpush1.msra.mxu0 0.0
        %1094 = vmatprep.subr.mxu0 0.0
        %1095 = vmatpush1.msra.mxu0 0.0
        %1096 = vmatprep.subr.mxu0 0.0
        %1097 = vmatpush1.msra.mxu0 0.0
        %1098 = vmatprep.subr.mxu0 0.0
        %1099 = vmatpush1.msra.mxu0 0.0
        %1100 = vmatprep.subr.mxu0 0.0
        %1101 = vmatpush1.msra.mxu0 0.0
        %1102 = vmatprep.subr.mxu0 0.0
        %1103 = vmatpush1.msra.mxu0 0.0
        %1104 = vmatprep.subr.mxu0 0.0
        %1105 = vmatpush1.msra.mxu0 0.0
        %1106 = vmatprep.subr.mxu0 0.0
        %1107 = vmatpush1.msra.mxu0 0.0
        %1108 = vmatprep.subr.mxu0 0.0
        %1109 = vmatpush1.msra.mxu0 0.0
        %1110 = vmatprep.subr.mxu0 0.0
        %1111 = vmatpush1.msra.mxu0 0.0
        %1112 = vmatprep.subr.mxu0 0.0
        %1113 = vmatpush1.msra.mxu0 0.0
        %1114 = vmatprep.subr.mxu0 0.0
        %1115 = vmatpush1.msra.mxu0 0.0
        %1116 = vmatprep.subr.mxu0 0.0
        %1117 = vmatpush1.msra.mxu0 0.0
        %1118 = vmatprep.subr.mxu0 0.0
        %1119 = vmatpush1.msra.mxu0 0.0
        %1120 = vmatprep.subr.mxu0 0.0
        %1121 = vmatpush1.msra.mxu0 0.0
        %1122 = vmatprep.subr.mxu0 0.0
        %1123 = vmatpush1.msra.mxu0 0.0
        %1124 = vmatprep.subr.mxu0 0.0
        %1125 = vmatpush1.msra.mxu0 0.0
        %1126 = vmatprep.subr.mxu0 0.0
        %1127 = vmatpush1.msra.mxu0 0.0
        %1128 = vmatprep.subr.mxu0 0.0
        %1129 = vmatpush1.msra.mxu0 0.0
        %1130 = vmatprep.subr.mxu0 0.0
        %1131 = vmatpush1.msra.mxu0 0.0
        %1132 = vmatprep.subr.mxu0 0.0
        %1133 = vmatpush1.msra.mxu0 0.0
        %1134 = vmatprep.subr.mxu0 0.0
        %1135 = vmatpush1.msra.mxu0 0.0
        %1136 = vmatprep.subr.mxu0 0.0
        %1137 = vmatpush1.msra.mxu0 0.0
        %1138 = vmatprep.subr.mxu0 0.0
        %1139 = vmatpush1.msra.mxu0 0.0
        %1140 = vmatprep.subr.mxu0 0.0
        %1141 = vmatpush1.msra.mxu0 0.0
        %1142 = vmatprep.subr.mxu0 0.0
        %1143 = vmatpush1.msra.mxu0 0.0
        %1144 = vmatprep.subr.mxu0 0.0
        %1145 = vmatpush1.msra.mxu0 0.0
        %1146 = vmatprep.subr.mxu0 0.0
        %1147 = vmatpush1.msra.mxu0 0.0
        %1148 = vmatprep.subr.mxu0 0.0
        %1149 = vmatpush1.msra.mxu0 0.0
        %1150 = vmatprep.subr.mxu0 0.0
        %1151 = vmatpush1.msra.mxu0 0.0
        %1152 = vmatprep.subr.mxu0 0.0
        %1153 = vmatpush1.msra.mxu0 0.0
        %1154 = vmatprep.mubr.f32.mxu0 0.0
        %1155 = vmatmul.mubr.f32.gmra.mrb[0].mxu0 %v1088
        %v1156 = vpop.f32.mrb[0].mxu0
        %v1157 = vadd.f32 0.0, %v1156
        %v1158 = vpop.f32.mrb[0].mxu0
        %1159 = vdwg.mxu0
        %v1161 = vsel %vm540, %v954, 0
        %1163 = vmatprep.subr.mxu0 0.0
        %1164 = vmatpush1.msra.mxu0 %v587
        %1165 = vmatprep.subr.mxu0 0.0
        %1166 = vmatpush1.msra.mxu0 0.0
        %1167 = vmatprep.subr.mxu0 0.0
        %1168 = vmatpush1.msra.mxu0 0.0
        %1169 = vmatprep.subr.mxu0 0.0
        %1170 = vmatpush1.msra.mxu0 0.0
        %1171 = vmatprep.subr.mxu0 0.0
        %1172 = vmatpush1.msra.mxu0 0.0
        %1173 = vmatprep.subr.mxu0 0.0
        %1174 = vmatpush1.msra.mxu0 0.0
        %1175 = vmatprep.subr.mxu0 0.0
        %1176 = vmatpush1.msra.mxu0 0.0
        %1177 = vmatprep.subr.mxu0 0.0
        %1178 = vmatpush1.msra.mxu0 0.0
        %1179 = vmatprep.subr.mxu0 0.0
        %1180 = vmatpush1.msra.mxu0 0.0
        %1181 = vmatprep.subr.mxu0 0.0
        %1182 = vmatpush1.msra.mxu0 0.0
        %1183 = vmatprep.subr.mxu0 0.0
        %1184 = vmatpush1.msra.mxu0 0.0
        %1185 = vmatprep.subr.mxu0 0.0
        %1186 = vmatpush1.msra.mxu0 0.0
        %1187 = vmatprep.subr.mxu0 0.0
        %1188 = vmatpush1.msra.mxu0 0.0
        %1189 = vmatprep.subr.mxu0 0.0
        %1190 = vmatpush1.msra.mxu0 0.0
        %1191 = vmatprep.subr.mxu0 0.0
        %1192 = vmatpush1.msra.mxu0 0.0
        %1193 = vmatprep.subr.mxu0 0.0
        %1194 = vmatpush1.msra.mxu0 0.0
        %1195 = vmatprep.subr.mxu0 0.0
        %1196 = vmatpush1.msra.mxu0 0.0
        %1197 = vmatprep.subr.mxu0 0.0
        %1198 = vmatpush1.msra.mxu0 0.0
        %1199 = vmatprep.subr.mxu0 0.0
        %1200 = vmatpush1.msra.mxu0 0.0
        %1201 = vmatprep.subr.mxu0 0.0
        %1202 = vmatpush1.msra.mxu0 0.0
        %1203 = vmatprep.subr.mxu0 0.0
        %1204 = vmatpush1.msra.mxu0 0.0
        %1205 = vmatprep.subr.mxu0 0.0
        %1206 = vmatpush1.msra.mxu0 0.0
        %1207 = vmatprep.subr.mxu0 0.0
        %1208 = vmatpush1.msra.mxu0 0.0
        %1209 = vmatprep.subr.mxu0 0.0
        %1210 = vmatpush1.msra.mxu0 0.0
        %1211 = vmatprep.subr.mxu0 0.0
        %1212 = vmatpush1.msra.mxu0 0.0
        %1213 = vmatprep.subr.mxu0 0.0
        %1214 = vmatpush1.msra.mxu0 0.0
        %1215 = vmatprep.subr.mxu0 0.0
        %1216 = vmatpush1.msra.mxu0 0.0
        %1217 = vmatprep.subr.mxu0 0.0
        %1218 = vmatpush1.msra.mxu0 0.0
        %1219 = vmatprep.subr.mxu0 0.0
        %1220 = vmatpush1.msra.mxu0 0.0
        %1221 = vmatprep.subr.mxu0 0.0
        %1222 = vmatpush1.msra.mxu0 0.0
        %1223 = vmatprep.subr.mxu0 0.0
        %1224 = vmatpush1.msra.mxu0 0.0
        %1225 = vmatprep.subr.mxu0 0.0
        %1226 = vmatpush1.msra.mxu0 0.0
        %1227 = vmatprep.mubr.f32.mxu0 0.0
        %1228 = vmatmul.mubr.f32.gmra.mrb[0].mxu0 %v1161
        %v1229 = vpop.f32.mrb[0].mxu0
        %v1230 = vadd.f32 0.0, %v1229
        %v1231 = vpop.f32.mrb[0].mxu0
        %1232 = vdwg.mxu0
        %v1234 = vsel %vm540, %v956, 0
        %1236 = vmatprep.subr.mxu0 0.0
        %1237 = vmatpush1.msra.mxu0 %v588
        %1238 = vmatprep.subr.mxu0 0.0
        %1239 = vmatpush1.msra.mxu0 0.0
        %1240 = vmatprep.subr.mxu0 0.0
        %1241 = vmatpush1.msra.mxu0 0.0
        %1242 = vmatprep.subr.mxu0 0.0
        %1243 = vmatpush1.msra.mxu0 0.0
        %1244 = vmatprep.subr.mxu0 0.0
        %1245 = vmatpush1.msra.mxu0 0.0
        %1246 = vmatprep.subr.mxu0 0.0
        %1247 = vmatpush1.msra.mxu0 0.0
        %1248 = vmatprep.subr.mxu0 0.0
        %1249 = vmatpush1.msra.mxu0 0.0
        %1250 = vmatprep.subr.mxu0 0.0
        %1251 = vmatpush1.msra.mxu0 0.0
        %1252 = vmatprep.subr.mxu0 0.0
        %1253 = vmatpush1.msra.mxu0 0.0
        %1254 = vmatprep.subr.mxu0 0.0
        %1255 = vmatpush1.msra.mxu0 0.0
        %1256 = vmatprep.subr.mxu0 0.0
        %1257 = vmatpush1.msra.mxu0 0.0
        %1258 = vmatprep.subr.mxu0 0.0
        %1259 = vmatpush1.msra.mxu0 0.0
        %1260 = vmatprep.subr.mxu0 0.0
        %1261 = vmatpush1.msra.mxu0 0.0
        %1262 = vmatprep.subr.mxu0 0.0
        %1263 = vmatpush1.msra.mxu0 0.0
        %1264 = vmatprep.subr.mxu0 0.0
        %1265 = vmatpush1.msra.mxu0 0.0
        %1266 = vmatprep.subr.mxu0 0.0
        %1267 = vmatpush1.msra.mxu0 0.0
        %1268 = vmatprep.subr.mxu0 0.0
        %1269 = vmatpush1.msra.mxu0 0.0
        %1270 = vmatprep.subr.mxu0 0.0
        %1271 = vmatpush1.msra.mxu0 0.0
        %1272 = vmatprep.subr.mxu0 0.0
        %1273 = vmatpush1.msra.mxu0 0.0
        %1274 = vmatprep.subr.mxu0 0.0
        %1275 = vmatpush1.msra.mxu0 0.0
        %1276 = vmatprep.subr.mxu0 0.0
        %1277 = vmatpush1.msra.mxu0 0.0
        %1278 = vmatprep.subr.mxu0 0.0
        %1279 = vmatpush1.msra.mxu0 0.0
        %1280 = vmatprep.subr.mxu0 0.0
        %1281 = vmatpush1.msra.mxu0 0.0
        %1282 = vmatprep.subr.mxu0 0.0
        %1283 = vmatpush1.msra.mxu0 0.0
        %1284 = vmatprep.subr.mxu0 0.0
        %1285 = vmatpush1.msra.mxu0 0.0
        %1286 = vmatprep.subr.mxu0 0.0
        %1287 = vmatpush1.msra.mxu0 0.0
        %1288 = vmatprep.subr.mxu0 0.0
        %1289 = vmatpush1.msra.mxu0 0.0
        %1290 = vmatprep.subr.mxu0 0.0
        %1291 = vmatpush1.msra.mxu0 0.0
        %1292 = vmatprep.subr.mxu0 0.0
        %1293 = vmatpush1.msra.mxu0 0.0
        %1294 = vmatprep.subr.mxu0 0.0
        %1295 = vmatpush1.msra.mxu0 0.0
        %1296 = vmatprep.subr.mxu0 0.0
        %1297 = vmatpush1.msra.mxu0 0.0
        %1298 = vmatprep.subr.mxu0 0.0
        %1299 = vmatpush1.msra.mxu0 0.0
        %1300 = vmatprep.mubr.f32.mxu0 0.0
        %1301 = vmatmul.mubr.f32.gmra.mrb[0].mxu0 %v1234
        %v1302 = vpop.f32.mrb[0].mxu0
        %v1303 = vadd.f32 0.0, %v1302
        %v1304 = vpop.f32.mrb[0].mxu0
        %1305 = vdwg.mxu0
        %v1306 = vadd.f32 %v1010, %v1084
        %v1307 = vadd.f32 %v1011, %v1157
        %v1308 = vadd.f32 %v1012, %v1230
        %v1309 = vadd.f32 %v1013, %v1303
        %1310 = vst.msk [vmem:[#allocation5] sm:$0xff] %vm540, %v1306
        %1311 = vst.msk [vmem:[#allocation5 + $0x8] sm:$0xff] %vm540, %v1307
        %1312 = vst.msk [vmem:[#allocation5 + $0x10] sm:$0xff] %vm540, %v1308
        %1313 = vst.msk [vmem:[#allocation5 + $0x18] sm:$0xff] %vm540, %v1309
        %1314 = vst.msk [vmem:[#allocation6] sm:$0xff] %vm981, %v909
        %1315 = vst.msk [vmem:[#allocation6 + $0x8] sm:$0xff] %vm981, %v910
        %1316 = vst.msk [vmem:[#allocation6 + $0x10] sm:$0xff] %vm981, %v911
        %1317 = vst.msk [vmem:[#allocation6 + $0x18] sm:$0xff] %vm981, %v912
        %p1318 = scmp.eq.s32.totalorder %s33, 1
        // Predicated region
        $region65: #{cross_attention.1} parent=39 // pred_check
          %p1319 = pneg %p1318
        $region66: #{cross_attention.1} parent=39 // pred_check_branch
          %1321 = sbr.rel (%p1319) target = $region68
        $region67: #{cross_attention.1} parent=39 // pred_region
          %v1322 = vld [vmem:[#allocation7] sm:$0xff]
          %v1323 = vld [vmem:[#allocation7 + $0x8] sm:$0xff]
          %v1324 = vld [vmem:[#allocation7 + $0x10] sm:$0xff]
          %v1325 = vld [vmem:[#allocation7 + $0x18] sm:$0xff]
          %v1326 = vrcp.pop %v1322
          %v1327 = vrcp.pop %v1323
          %v1328 = vrcp.pop %v1324
          %v1329 = vrcp.pop %v1325
          %v1330 = vld [vmem:[#allocation5] sm:$0xff]
          %v1331 = vld [vmem:[#allocation5 + $0x8] sm:$0xff]
          %v1332 = vld [vmem:[#allocation5 + $0x10] sm:$0xff]
          %v1333 = vld [vmem:[#allocation5 + $0x18] sm:$0xff]
          %1335 = vset.pattern.permute.xlu0 0
          %1336 = vperm.xlu0 %1335, %v1326
          %v1337 = vpop.permute.xlu0 %1336
          %1340 = vset.pattern.permute.xlu0 0
          %1341 = vperm.xlu0 %1340, %v1327
          %v1342 = vpop.permute.xlu0 %1341
          %1345 = vset.pattern.permute.xlu0 0
          %1346 = vperm.xlu0 %1345, %v1328
          %v1347 = vpop.permute.xlu0 %1346
          %1350 = vset.pattern.permute.xlu0 0
          %1351 = vperm.xlu0 %1350, %v1329
          %v1352 = vpop.permute.xlu0 %1351
          %v1354 = vmul.f32 %v1330, %v1337
          %v1355 = vmul.f32 %v1331, %v1342
          %v1356 = vmul.f32 %v1332, %v1347
          %v1357 = vmul.f32 %v1333, %v1352
          %v1358 = vld [vmem:[#allocation16] sm:$0xff]
          %v1359 = vld [vmem:[#allocation16 + $0x8] sm:$0xff]
          %v1360 = vld [vmem:[#allocation16 + $0x10] sm:$0xff]
          %v1361 = vld [vmem:[#allocation16 + $0x18] sm:$0xff]
          %v1363 = vsel %vm540, %v1354, 0
          %1365 = vmatprep.subr.mxu0 0.0
          %1366 = vmatpush1.msra.mxu0 %v1358
          %1367 = vmatprep.subr.mxu0 0.0
          %1368 = vmatpush1.msra.mxu0 0.0
          %1369 = vmatprep.subr.mxu0 0.0
          %1370 = vmatpush1.msra.mxu0 0.0
          %1371 = vmatprep.subr.mxu0 0.0
          %1372 = vmatpush1.msra.mxu0 0.0
          %1373 = vmatprep.subr.mxu0 0.0
          %1374 = vmatpush1.msra.mxu0 0.0
          %1375 = vmatprep.subr.mxu0 0.0
          %1376 = vmatpush1.msra.mxu0 0.0
          %1377 = vmatprep.subr.mxu0 0.0
          %1378 = vmatpush1.msra.mxu0 0.0
          %1379 = vmatprep.subr.mxu0 0.0
          %1380 = vmatpush1.msra.mxu0 0.0
          %1381 = vmatprep.subr.mxu0 0.0
          %1382 = vmatpush1.msra.mxu0 0.0
          %1383 = vmatprep.subr.mxu0 0.0
          %1384 = vmatpush1.msra.mxu0 0.0
          %1385 = vmatprep.subr.mxu0 0.0
          %1386 = vmatpush1.msra.mxu0 0.0
          %1387 = vmatprep.subr.mxu0 0.0
          %1388 = vmatpush1.msra.mxu0 0.0
          %1389 = vmatprep.subr.mxu0 0.0
          %1390 = vmatpush1.msra.mxu0 0.0
          %1391 = vmatprep.subr.mxu0 0.0
          %1392 = vmatpush1.msra.mxu0 0.0
          %1393 = vmatprep.subr.mxu0 0.0
          %1394 = vmatpush1.msra.mxu0 0.0
          %1395 = vmatprep.subr.mxu0 0.0
          %1396 = vmatpush1.msra.mxu0 0.0
          %1397 = vmatprep.subr.mxu0 0.0
          %1398 = vmatpush1.msra.mxu0 0.0
          %1399 = vmatprep.subr.mxu0 0.0
          %1400 = vmatpush1.msra.mxu0 0.0
          %1401 = vmatprep.subr.mxu0 0.0
          %1402 = vmatpush1.msra.mxu0 0.0
          %1403 = vmatprep.subr.mxu0 0.0
          %1404 = vmatpush1.msra.mxu0 0.0
          %1405 = vmatprep.subr.mxu0 0.0
          %1406 = vmatpush1.msra.mxu0 0.0
          %1407 = vmatprep.subr.mxu0 0.0
          %1408 = vmatpush1.msra.mxu0 0.0
          %1409 = vmatprep.subr.mxu0 0.0
          %1410 = vmatpush1.msra.mxu0 0.0
          %1411 = vmatprep.subr.mxu0 0.0
          %1412 = vmatpush1.msra.mxu0 0.0
          %1413 = vmatprep.subr.mxu0 0.0
          %1414 = vmatpush1.msra.mxu0 0.0
          %1415 = vmatprep.subr.mxu0 0.0
          %1416 = vmatpush1.msra.mxu0 0.0
          %1417 = vmatprep.subr.mxu0 0.0
          %1418 = vmatpush1.msra.mxu0 0.0
          %1419 = vmatprep.subr.mxu0 0.0
          %1420 = vmatpush1.msra.mxu0 0.0
          %1421 = vmatprep.subr.mxu0 0.0
          %1422 = vmatpush1.msra.mxu0 0.0
          %1423 = vmatprep.subr.mxu0 0.0
          %1424 = vmatpush1.msra.mxu0 0.0
          %1425 = vmatprep.subr.mxu0 0.0
          %1426 = vmatpush1.msra.mxu0 0.0
          %1427 = vmatprep.subr.mxu0 0.0
          %1428 = vmatpush1.msra.mxu0 0.0
          %1429 = vmatprep.mubr.f32.mxu0 0.0
          %1430 = vmatmul.mubr.f32.gmra.mrb[0].mxu0 %v1363
          %v1431 = vpop.f32.mrb[0].mxu0
          %v1432 = vadd.f32 0.0, %v1431
          %v1433 = vpop.f32.mrb[0].mxu0
          %1434 = vdwg.mxu0
          %v1436 = vsel %vm540, %v1355, 0
          %1438 = vmatprep.subr.mxu0 0.0
          %1439 = vmatpush1.msra.mxu0 %v1359
          %1440 = vmatprep.subr.mxu0 0.0
          %1441 = vmatpush1.msra.mxu0 0.0
          %1442 = vmatprep.subr.mxu0 0.0
          %1443 = vmatpush1.msra.mxu0 0.0
          %1444 = vmatprep.subr.mxu0 0.0
          %1445 = vmatpush1.msra.mxu0 0.0
          %1446 = vmatprep.subr.mxu0 0.0
          %1447 = vmatpush1.msra.mxu0 0.0
          %1448 = vmatprep.subr.mxu0 0.0
          %1449 = vmatpush1.msra.mxu0 0.0
          %1450 = vmatprep.subr.mxu0 0.0
          %1451 = vmatpush1.msra.mxu0 0.0
          %1452 = vmatprep.subr.mxu0 0.0
          %1453 = vmatpush1.msra.mxu0 0.0
          %1454 = vmatprep.subr.mxu0 0.0
          %1455 = vmatpush1.msra.mxu0 0.0
          %1456 = vmatprep.subr.mxu0 0.0
          %1457 = vmatpush1.msra.mxu0 0.0
          %1458 = vmatprep.subr.mxu0 0.0
          %1459 = vmatpush1.msra.mxu0 0.0
          %1460 = vmatprep.subr.mxu0 0.0
          %1461 = vmatpush1.msra.mxu0 0.0
          %1462 = vmatprep.subr.mxu0 0.0
          %1463 = vmatpush1.msra.mxu0 0.0
          %1464 = vmatprep.subr.mxu0 0.0
          %1465 = vmatpush1.msra.mxu0 0.0
          %1466 = vmatprep.subr.mxu0 0.0
          %1467 = vmatpush1.msra.mxu0 0.0
          %1468 = vmatprep.subr.mxu0 0.0
          %1469 = vmatpush1.msra.mxu0 0.0
          %1470 = vmatprep.subr.mxu0 0.0
          %1471 = vmatpush1.msra.mxu0 0.0
          %1472 = vmatprep.subr.mxu0 0.0
          %1473 = vmatpush1.msra.mxu0 0.0
          %1474 = vmatprep.subr.mxu0 0.0
          %1475 = vmatpush1.msra.mxu0 0.0
          %1476 = vmatprep.subr.mxu0 0.0
          %1477 = vmatpush1.msra.mxu0 0.0
          %1478 = vmatprep.subr.mxu0 0.0
          %1479 = vmatpush1.msra.mxu0 0.0
          %1480 = vmatprep.subr.mxu0 0.0
          %1481 = vmatpush1.msra.mxu0 0.0
          %1482 = vmatprep.subr.mxu0 0.0
          %1483 = vmatpush1.msra.mxu0 0.0
          %1484 = vmatprep.subr.mxu0 0.0
          %1485 = vmatpush1.msra.mxu0 0.0
          %1486 = vmatprep.subr.mxu0 0.0
          %1487 = vmatpush1.msra.mxu0 0.0
          %1488 = vmatprep.subr.mxu0 0.0
          %1489 = vmatpush1.msra.mxu0 0.0
          %1490 = vmatprep.subr.mxu0 0.0
          %1491 = vmatpush1.msra.mxu0 0.0
          %1492 = vmatprep.subr.mxu0 0.0
          %1493 = vmatpush1.msra.mxu0 0.0
          %1494 = vmatprep.subr.mxu0 0.0
          %1495 = vmatpush1.msra.mxu0 0.0
          %1496 = vmatprep.subr.mxu0 0.0
          %1497 = vmatpush1.msra.mxu0 0.0
          %1498 = vmatprep.subr.mxu0 0.0
          %1499 = vmatpush1.msra.mxu0 0.0
          %1500 = vmatprep.subr.mxu0 0.0
          %1501 = vmatpush1.msra.mxu0 0.0
          %1502 = vmatprep.mubr.f32.mxu0 0.0
          %1503 = vmatmul.mubr.f32.gmra.mrb[0].mxu0 %v1436
          %v1504 = vpop.f32.mrb[0].mxu0
          %v1505 = vadd.f32 0.0, %v1504
          %v1506 = vpop.f32.mrb[0].mxu0
          %1507 = vdwg.mxu0
          %v1509 = vsel %vm540, %v1356, 0
          %1511 = vmatprep.subr.mxu0 0.0
          %1512 = vmatpush1.msra.mxu0 %v1360
          %1513 = vmatprep.subr.mxu0 0.0
          %1514 = vmatpush1.msra.mxu0 0.0
          %1515 = vmatprep.subr.mxu0 0.0
          %1516 = vmatpush1.msra.mxu0 0.0
          %1517 = vmatprep.subr.mxu0 0.0
          %1518 = vmatpush1.msra.mxu0 0.0
          %1519 = vmatprep.subr.mxu0 0.0
          %1520 = vmatpush1.msra.mxu0 0.0
          %1521 = vmatprep.subr.mxu0 0.0
          %1522 = vmatpush1.msra.mxu0 0.0
          %1523 = vmatprep.subr.mxu0 0.0
          %1524 = vmatpush1.msra.mxu0 0.0
          %1525 = vmatprep.subr.mxu0 0.0
          %1526 = vmatpush1.msra.mxu0 0.0
          %1527 = vmatprep.subr.mxu0 0.0
          %1528 = vmatpush1.msra.mxu0 0.0
          %1529 = vmatprep.subr.mxu0 0.0
          %1530 = vmatpush1.msra.mxu0 0.0
          %1531 = vmatprep.subr.mxu0 0.0
          %1532 = vmatpush1.msra.mxu0 0.0
          %1533 = vmatprep.subr.mxu0 0.0
          %1534 = vmatpush1.msra.mxu0 0.0
          %1535 = vmatprep.subr.mxu0 0.0
          %1536 = vmatpush1.msra.mxu0 0.0
          %1537 = vmatprep.subr.mxu0 0.0
          %1538 = vmatpush1.msra.mxu0 0.0
          %1539 = vmatprep.subr.mxu0 0.0
          %1540 = vmatpush1.msra.mxu0 0.0
          %1541 = vmatprep.subr.mxu0 0.0
          %1542 = vmatpush1.msra.mxu0 0.0
          %1543 = vmatprep.subr.mxu0 0.0
          %1544 = vmatpush1.msra.mxu0 0.0
          %1545 = vmatprep.subr.mxu0 0.0
          %1546 = vmatpush1.msra.mxu0 0.0
          %1547 = vmatprep.subr.mxu0 0.0
          %1548 = vmatpush1.msra.mxu0 0.0
          %1549 = vmatprep.subr.mxu0 0.0
          %1550 = vmatpush1.msra.mxu0 0.0
          %1551 = vmatprep.subr.mxu0 0.0
          %1552 = vmatpush1.msra.mxu0 0.0
          %1553 = vmatprep.subr.mxu0 0.0
          %1554 = vmatpush1.msra.mxu0 0.0
          %1555 = vmatprep.subr.mxu0 0.0
          %1556 = vmatpush1.msra.mxu0 0.0
          %1557 = vmatprep.subr.mxu0 0.0
          %1558 = vmatpush1.msra.mxu0 0.0
          %1559 = vmatprep.subr.mxu0 0.0
          %1560 = vmatpush1.msra.mxu0 0.0
          %1561 = vmatprep.subr.mxu0 0.0
          %1562 = vmatpush1.msra.mxu0 0.0
          %1563 = vmatprep.subr.mxu0 0.0
          %1564 = vmatpush1.msra.mxu0 0.0
          %1565 = vmatprep.subr.mxu0 0.0
          %1566 = vmatpush1.msra.mxu0 0.0
          %1567 = vmatprep.subr.mxu0 0.0
          %1568 = vmatpush1.msra.mxu0 0.0
          %1569 = vmatprep.subr.mxu0 0.0
          %1570 = vmatpush1.msra.mxu0 0.0
          %1571 = vmatprep.subr.mxu0 0.0
          %1572 = vmatpush1.msra.mxu0 0.0
          %1573 = vmatprep.subr.mxu0 0.0
          %1574 = vmatpush1.msra.mxu0 0.0
          %1575 = vmatprep.mubr.f32.mxu0 0.0
          %1576 = vmatmul.mubr.f32.gmra.mrb[0].mxu0 %v1509
          %v1577 = vpop.f32.mrb[0].mxu0
          %v1578 = vadd.f32 0.0, %v1577
          %v1579 = vpop.f32.mrb[0].mxu0
          %1580 = vdwg.mxu0
          %v1582 = vsel %vm540, %v1357, 0
          %1584 = vmatprep.subr.mxu0 0.0
          %1585 = vmatpush1.msra.mxu0 %v1361
          %1586 = vmatprep.subr.mxu0 0.0
          %1587 = vmatpush1.msra.mxu0 0.0
          %1588 = vmatprep.subr.mxu0 0.0
          %1589 = vmatpush1.msra.mxu0 0.0
          %1590 = vmatprep.subr.mxu0 0.0
          %1591 = vmatpush1.msra.mxu0 0.0
          %1592 = vmatprep.subr.mxu0 0.0
          %1593 = vmatpush1.msra.mxu0 0.0
          %1594 = vmatprep.subr.mxu0 0.0
          %1595 = vmatpush1.msra.mxu0 0.0
          %1596 = vmatprep.subr.mxu0 0.0
          %1597 = vmatpush1.msra.mxu0 0.0
          %1598 = vmatprep.subr.mxu0 0.0
          %1599 = vmatpush1.msra.mxu0 0.0
          %1600 = vmatprep.subr.mxu0 0.0
          %1601 = vmatpush1.msra.mxu0 0.0
          %1602 = vmatprep.subr.mxu0 0.0
          %1603 = vmatpush1.msra.mxu0 0.0
          %1604 = vmatprep.subr.mxu0 0.0
          %1605 = vmatpush1.msra.mxu0 0.0
          %1606 = vmatprep.subr.mxu0 0.0
          %1607 = vmatpush1.msra.mxu0 0.0
          %1608 = vmatprep.subr.mxu0 0.0
          %1609 = vmatpush1.msra.mxu0 0.0
          %1610 = vmatprep.subr.mxu0 0.0
          %1611 = vmatpush1.msra.mxu0 0.0
          %1612 = vmatprep.subr.mxu0 0.0
          %1613 = vmatpush1.msra.mxu0 0.0
          %1614 = vmatprep.subr.mxu0 0.0
          %1615 = vmatpush1.msra.mxu0 0.0
          %1616 = vmatprep.subr.mxu0 0.0
          %1617 = vmatpush1.msra.mxu0 0.0
          %1618 = vmatprep.subr.mxu0 0.0
          %1619 = vmatpush1.msra.mxu0 0.0
          %1620 = vmatprep.subr.mxu0 0.0
          %1621 = vmatpush1.msra.mxu0 0.0
          %1622 = vmatprep.subr.mxu0 0.0
          %1623 = vmatpush1.msra.mxu0 0.0
          %1624 = vmatprep.subr.mxu0 0.0
          %1625 = vmatpush1.msra.mxu0 0.0
          %1626 = vmatprep.subr.mxu0 0.0
          %1627 = vmatpush1.msra.mxu0 0.0
          %1628 = vmatprep.subr.mxu0 0.0
          %1629 = vmatpush1.msra.mxu0 0.0
          %1630 = vmatprep.subr.mxu0 0.0
          %1631 = vmatpush1.msra.mxu0 0.0
          %1632 = vmatprep.subr.mxu0 0.0
          %1633 = vmatpush1.msra.mxu0 0.0
          %1634 = vmatprep.subr.mxu0 0.0
          %1635 = vmatpush1.msra.mxu0 0.0
          %1636 = vmatprep.subr.mxu0 0.0
          %1637 = vmatpush1.msra.mxu0 0.0
          %1638 = vmatprep.subr.mxu0 0.0
          %1639 = vmatpush1.msra.mxu0 0.0
          %1640 = vmatprep.subr.mxu0 0.0
          %1641 = vmatpush1.msra.mxu0 0.0
          %1642 = vmatprep.subr.mxu0 0.0
          %1643 = vmatpush1.msra.mxu0 0.0
          %1644 = vmatprep.subr.mxu0 0.0
          %1645 = vmatpush1.msra.mxu0 0.0
          %1646 = vmatprep.subr.mxu0 0.0
          %1647 = vmatpush1.msra.mxu0 0.0
          %1648 = vmatprep.mubr.f32.mxu0 0.0
          %1649 = vmatmul.mubr.f32.gmra.mrb[0].mxu0 %v1582
          %v1650 = vpop.f32.mrb[0].mxu0
          %v1651 = vadd.f32 0.0, %v1650
          %v1652 = vpop.f32.mrb[0].mxu0
          %1653 = vdwg.mxu0
          %v1654 = vadd.f32 %v1432, %v1505
          %v1655 = vadd.f32 %v1654, %v1578
          %v1656 = vadd.f32 %v1655, %v1651
          %vm1657 = vcmask 261120
          %1658 = vst.msk [vmem:[%s347] sm:$0xff] %vm1657, %v1656
        $region68: #{cross_attention.1} parent=39 // pred_fallthru
          _
        %s1659 = sand.u32 %s174, 1
        %s1660 = scalar_lea.sflag [#allocation10], %s1659
        %s1661 = sand.u32 %s174, 1
        %s1662 = smul.addr %s1661, 8
        %s1663 = scalar_lea.vmem [#allocation17], %s1662
        // Predicated region
        $region69: #{cross_attention.1} parent=39 // pred_check
          %p1664 = pneg %p184
        $region70: #{cross_attention.1} parent=39 // pred_check_branch
          %1666 = sbr.rel (%p1664) target = $region72
        $region71: #{cross_attention.1} parent=39 // pred_region
          %s1668 = ssub.s32 128, 128
          %1669 = vsyncadd %s1660, %s1668
          %s1670 = sadd.s32 %s32, %s31
          %s1671 = smul.addr %s1670, 128
          %s1672 = scalar_lea.hbm %s5, %s1671
          %s1674 = sshll.u32 %s1663, 4
          %s1675 = int_to_ptr.vmem [resolvable:$true] %s1674
          %1677 = dma.vmem_to_hbm [thread:$0]  %s1675, 128, %s1672, %s1660
        $region72: #{cross_attention.1} parent=39 // pred_fallthru
          _
      $region40: #{cross_attention.1} parent=5 // pred_fallthru
        _
      %p1678 = scmp.le.s32.totalorder 2, %s21
      // Predicated region
      $region73: #{cross_attention.1} parent=5 // pred_check
        %p1679 = pneg %p1678
      $region74: #{cross_attention.1} parent=5 // pred_check_branch
        %1681 = sbr.rel (%p1679) target = $region76
      $region75: #{cross_attention.1} parent=5 // pred_region
        %s1682 = ssub.s32 %s21, 2
        // Predicated region
        $region77: #{cross_attention.1} parent=75 // pred_check
          %p1683 = pneg %p190
        $region78: #{cross_attention.1} parent=75 // pred_check_branch
          %1685 = sbr.rel (%p1683) target = $region80
        $region79: #{cross_attention.1} parent=75 // pred_region
          %s1686 = sand.u32 %s175, 1
          %s1687 = scalar_lea.sflag [#allocation10], %s1686
          %s1688 = sand.u32 %s175, 1
          %s1689 = smul.addr %s1688, 8
          %s1690 = scalar_lea.vmem [#allocation17], %s1689
          %1691 = dma.done %s1687, 128
        $region80: #{cross_attention.1} parent=75 // pred_fallthru
          _
      $region76: #{cross_attention.1} parent=5 // pred_fallthru
        _
    $region6: #{cross_attention.1} parent=1 // loop_footer
      %s25 = sadd.s32 1, %s21
    $region7: #{cross_attention.1} parent=1 // loop_footer_branch
      %20 = sbr.rel target = $region3
    $region8: #{cross_attention.1} parent=1 // loop_exit
      _
    %1692 = vsyncpa [#allocation9], 1
    %s1693 = scalar_lea.sflag [#allocation9], 1
    %1694 = vsyncpa %s1693, 1
    %1695 = vsyncpa [#allocation12], 1
    %s1696 = scalar_lea.sflag [#allocation12], 1
    %1697 = vsyncpa %s1696, 1
    %1698 = vsyncpa [#allocation15], 1
    %1699 = vsyncpa [#allocation10], 1
    %s1700 = scalar_lea.sflag [#allocation10], 1
    %1701 = vsyncpa %s1700, 1

</llo_original>
